<compile_context>
chip_gen: v7x
topology: tpu7x:2x2x1
jax: 0.10.0
libtpu: 0.0.40
codegen_flags: <defaults>
</compile_context>

<pallas_src>
import math

import jax
import jax.numpy as jnp
from jax.experimental import pallas as pl
from jax.experimental.pallas import tpu as pltpu

LATENT = 2
HID = 400
OUT = 784
HID_PAD = 512   # 400 -> multiple of 128 lanes (fc3 output / fc4 contraction)
OUT_PAD = 896   # 784 -> multiple of 128 lanes (MXU N dim for w4 only)


def _round_up(x, m):
    return -(-x // m) * m


def decoder_kernel(z_ref, w3_ref, b3_ref, w4_ref, b4_ref, o_ref):
    # fc3: contraction depth is only 2 -> two broadcast FMAs on the VPU
    # (a depth-2 MXU pass is pure latency/padding waste).
    z = z_ref[...]                                    # (tb, 2)    f32
    w3 = w3_ref[...]                                  # (2, 512)   f32
    h3 = z[:, 0:1] * w3[0:1, :] + z[:, 1:2] * w3[1:2, :] + b3_ref[...]
    h3 = jnp.maximum(h3, 0.0)                         # relu, f32

    # fc4: bf16 operands on the MXU, f32 accumulation.
    y = jnp.dot(h3.astype(jnp.bfloat16), w4_ref[...],
                preferred_element_type=jnp.float32)   # (tb, 896)  f32
    y = y[:, :OUT] + b4_ref[...]                      # (tb, 784)  f32 epilogue

    # sigmoid(y) = 0.5*tanh(0.5*y) + 0.5  -> single EUP op per element.
    o_ref[...] = (0.5 * jnp.tanh(0.5 * y) + 0.5).astype(o_ref.dtype)


def decoder_forward(z, w3p, b3p, w4p, b4p, *, batch_tile=512,
                    out_dtype=jnp.float32):
    """z: (B, 2) f32.  Params are the padded versions from pad_params()."""
    batch = z.shape[0]

    # Batch tile: multiple of 8 sublanes; big tiles amortize grid-step
    # overhead and push HBM efficiency toward roofline.
    tb = min(batch_tile, _round_up(batch, 8))
    bp = _round_up(batch, tb)
    if bp // tb < 2 and tb >= 16:
        # Guarantee >=2 grid steps so the "parallel" batch axis can be
        # sharded across both TensorCores on v7x.
        tb = _round_up(tb // 2, 8)
        bp = _round_up(batch, tb)

    zp = z
    if bp != batch:
        zp = jnp.zeros((bp, LATENT), z.dtype).at[:batch].set(z)

    grid = (bp // tb,)
    out_bytes = bp * OUT * jnp.dtype(out_dtype).itemsize
    bytes_accessed = (zp.size * 4 + w3p.size * 4 + b3p.size * 4
                      + w4p.size * 2 + b4p.size * 4 + out_bytes)

    out = pl.pallas_call(
        decoder_kernel,
        out_shape=jax.ShapeDtypeStruct((bp, OUT), out_dtype),
        grid_spec=pltpu.PrefetchScalarGridSpec(
            num_scalar_prefetch=0,
            grid=grid,
            in_specs=[
                pl.BlockSpec((tb, LATENT), lambda i: (i, 0)),
                # Weights / biases: constant block index -> VMEM-resident;
                # single-buffered (second pipeline buffer is dead weight).
                pl.BlockSpec((LATENT, HID_PAD), lambda i: (0, 0),
                             pipeline_mode=pl.Buffered(1)),
                pl.BlockSpec((1, HID_PAD), lambda i: (0, 0),
                             pipeline_mode=pl.Buffered(1)),
                pl.BlockSpec((HID_PAD, OUT_PAD), lambda i: (0, 0),
                             pipeline_mode=pl.Buffered(1)),
                pl.BlockSpec((1, OUT), lambda i: (0, 0),
                             pipeline_mode=pl.Buffered(1)),
            ],
            # Unpadded, lane-dense output block: no wrapper-side slice pass.
            out_specs=pl.BlockSpec((tb, OUT), lambda i: (i, 0)),
        ),
        compiler_params=pltpu.CompilerParams(
            dimension_semantics=("parallel",),   # v7x: shard batch over 2 TCs
        ),
        cost_estimate=pl.CostEstimate(
            flops=2 * bp * HID_PAD * OUT_PAD,    # fc4 MXU only; fc3 is on VPU
            transcendentals=bp * OUT,            # one tanh per output element
            bytes_accessed=bytes_accessed,
        ),
    )(zp, w3p, b3p, w4p, b4p)

    # Drop batch padding (no-op when batch is already a tile multiple).
    return out[:batch]


def init_params(key):
    """nn.Linear-style U(-1/sqrt(fan_in), 1/sqrt(fan_in)), stored as (in, out)."""
    k3w, k3b, k4w, k4b = jax.random.split(key, 4)
    bound3 = 1.0 / math.sqrt(LATENT)
    bound4 = 1.0 / math.sqrt(HID)
    w3 = jax.random.uniform(k3w, (LATENT, HID), jnp.float32, -bound3, bound3)
    b3 = jax.random.uniform(k3b, (HID,), jnp.float32, -bound3, bound3)
    w4 = jax.random.uniform(k4w, (HID, OUT), jnp.float32, -bound4, bound4)
    b4 = jax.random.uniform(k4b, (OUT,), jnp.float32, -bound4, bound4)
    return w3, b3, w4, b4


def pad_params(w3, b3, w4, b4):
    """Pad MXU operands to 128-lane multiples; w4 kept in bf16 (HBM-bound)."""
    w3p = jnp.zeros((LATENT, HID_PAD), jnp.float32).at[:, :HID].set(w3)
    b3p = jnp.zeros((1, HID_PAD), jnp.float32).at[0, :HID].set(b3)
    w4p = jnp.zeros((HID_PAD, OUT_PAD), jnp.bfloat16).at[:HID, :OUT].set(
        w4.astype(jnp.bfloat16))
    b4p = b4.reshape(1, OUT).astype(jnp.float32)   # bias stays unpadded
    return w3p, b3p, w4p, b4p


if __name__ == "__main__":
    key = jax.random.PRNGKey(0)
    k_param, k_z = jax.random.split(key)

    w3, b3, w4, b4 = init_params(k_param)
    params = pad_params(w3, b3, w4, b4)

    batch = 8
    z = jax.random.normal(k_z, (batch, LATENT), jnp.float32)  # latent dim = 2

    out = decoder_forward(z, *params)
    out = jax.block_until_ready(out)
    assert out.shape == (batch, OUT)
    assert out.dtype == jnp.float32

    # Reference with matching bf16 fc4 weights; remaining delta is bf16
    # rounding of the matmul operands (sigmoid via tanh is exact).
    h3_ref = jnp.maximum(z @ w3 + b3, 0.0)
    y_ref = (h3_ref.astype(jnp.bfloat16).astype(jnp.float32)
             @ w4.astype(jnp.bfloat16).astype(jnp.float32)) + b4
    ref = jax.nn.sigmoid(y_ref)
    assert jnp.allclose(out, ref, atol=5e-3, rtol=5e-3), \
        float(jnp.max(jnp.abs(out - ref)))

    print("KERNEL_OK")
</pallas_src>

<mosaic_0001>
module attributes {stable_mosaic.version = 11 : i64} {
  func.func @decoder_kernel(%arg0: i32, %arg1: memref<8x2xf32, #tpu.memory_space<vmem>>, %arg2: memref<2x512xf32, #tpu.memory_space<vmem>>, %arg3: memref<1x512xf32, #tpu.memory_space<vmem>>, %arg4: memref<512x896xbf16, #tpu.memory_space<vmem>>, %arg5: memref<1x784xf32, #tpu.memory_space<vmem>>, %arg6: memref<8x784xf32, #tpu.memory_space<vmem>>) attributes {dimension_semantics = [#tpu.dimension_semantics<parallel>], iteration_bounds = array<i64: 1>, scalar_prefetch = 0 : i64, scratch_operands = 0 : i64, tpu.core_type = #tpu.core_type<tc>, window_params = [{transform_indices = @transform_0, window_bounds = array<i64: 8, 2>}, {pipeline_mode = #tpu.pipeline_mode<synchronous>, transform_indices = @transform_1, window_bounds = array<i64: 2, 512>}, {pipeline_mode = #tpu.pipeline_mode<synchronous>, transform_indices = @transform_2, window_bounds = array<i64: 1, 512>}, {pipeline_mode = #tpu.pipeline_mode<synchronous>, transform_indices = @transform_3, window_bounds = array<i64: 512, 896>}, {pipeline_mode = #tpu.pipeline_mode<synchronous>, transform_indices = @transform_4, window_bounds = array<i64: 1, 784>}, {transform_indices = @transform_5, window_bounds = array<i64: 8, 784>}]} {
    %c0 = arith.constant 0 : index
    %c0_0 = arith.constant 0 : index
    %0 = vector.load %arg1[%c0, %c0_0] : memref<8x2xf32, #tpu.memory_space<vmem>>, vector<8x2xf32>
    %c0_1 = arith.constant 0 : index
    %c0_2 = arith.constant 0 : index
    %1 = vector.load %arg2[%c0_1, %c0_2] : memref<2x512xf32, #tpu.memory_space<vmem>>, vector<2x512xf32>
    %2 = vector.extract_strided_slice %0 {offsets = [0, 0], sizes = [8, 1], strides = [1, 1]} : vector<8x2xf32> to vector<8x1xf32>
    %3 = vector.extract_strided_slice %1 {offsets = [0, 0], sizes = [1, 512], strides = [1, 1]} : vector<2x512xf32> to vector<1x512xf32>
    %4 = vector.broadcast %2 : vector<8x1xf32> to vector<8x512xf32>
    %5 = vector.broadcast %3 : vector<1x512xf32> to vector<8x512xf32>
    %6 = arith.mulf %4, %5 : vector<8x512xf32>
    %7 = vector.extract_strided_slice %0 {offsets = [0, 1], sizes = [8, 1], strides = [1, 1]} : vector<8x2xf32> to vector<8x1xf32>
    %8 = vector.extract_strided_slice %1 {offsets = [1, 0], sizes = [1, 512], strides = [1, 1]} : vector<2x512xf32> to vector<1x512xf32>
    %9 = vector.broadcast %7 : vector<8x1xf32> to vector<8x512xf32>
    %10 = vector.broadcast %8 : vector<1x512xf32> to vector<8x512xf32>
    %11 = arith.mulf %9, %10 : vector<8x512xf32>
    %12 = arith.addf %6, %11 : vector<8x512xf32>
    %c0_3 = arith.constant 0 : index
    %c0_4 = arith.constant 0 : index
    %13 = vector.load %arg3[%c0_3, %c0_4] : memref<1x512xf32, #tpu.memory_space<vmem>>, vector<1x512xf32>
    %14 = vector.broadcast %13 : vector<1x512xf32> to vector<8x512xf32>
    %15 = arith.addf %12, %14 : vector<8x512xf32>
    %cst = arith.constant 0.000000e+00 : f32
    %16 = vector.broadcast %cst : f32 to vector<8x512xf32>
    %17 = arith.maximumf %15, %16 : vector<8x512xf32>
    %18 = arith.truncf %17 : vector<8x512xf32> to vector<8x512xbf16>
    %c0_5 = arith.constant 0 : index
    %c0_6 = arith.constant 0 : index
    %19 = vector.load %arg4[%c0_5, %c0_6] : memref<512x896xbf16, #tpu.memory_space<vmem>>, vector<512x896xbf16>
    %cst_7 = arith.constant dense<0.000000e+00> : vector<8x896xf32>
    %20 = tpu.matmul %18, %19, %cst_7 {dimension_numbers = #tpu.dot_dimension_numbers<[1], [0], [0], [1], [0, 0, 1, 1], [], []>} : vector<8x512xbf16>, vector<512x896xbf16>, vector<8x896xf32> -> vector<8x896xf32>
    %21 = vector.extract_strided_slice %20 {offsets = [0, 0], sizes = [8, 784], strides = [1, 1]} : vector<8x896xf32> to vector<8x784xf32>
    %c0_8 = arith.constant 0 : index
    %c0_9 = arith.constant 0 : index
    %22 = vector.load %arg5[%c0_8, %c0_9] : memref<1x784xf32, #tpu.memory_space<vmem>>, vector<1x784xf32>
    %23 = vector.broadcast %22 : vector<1x784xf32> to vector<8x784xf32>
    %24 = arith.addf %21, %23 : vector<8x784xf32>
    %cst_10 = arith.constant 5.000000e-01 : f32
    %25 = vector.broadcast %cst_10 : f32 to vector<8x784xf32>
    %26 = arith.mulf %25, %24 : vector<8x784xf32>
    %27 = math.tanh %26 : vector<8x784xf32>
    %cst_11 = arith.constant 5.000000e-01 : f32
    %28 = vector.broadcast %cst_11 : f32 to vector<8x784xf32>
    %29 = arith.mulf %28, %27 : vector<8x784xf32>
    %cst_12 = arith.constant 5.000000e-01 : f32
    %30 = vector.broadcast %cst_12 : f32 to vector<8x784xf32>
    %31 = arith.addf %29, %30 : vector<8x784xf32>
    %c0_13 = arith.constant 0 : index
    %c0_14 = arith.constant 0 : index
    %32 = vector.load %arg6[%c0_13, %c0_14] : memref<8x784xf32, #tpu.memory_space<vmem>>, vector<8x784xf32>
    tpu.vector_store %arg6[%c0_13, %c0_14], %31 {strides = array<i32>} : memref<8x784xf32, #tpu.memory_space<vmem>>, vector<8x784xf32>,
    return
  }
  func.func @transform_0(%arg0: i32) -> (i32, i32) {
    %c0_i32 = arith.constant 0 : i32
    %c0_i32_0 = arith.constant 0 : i32
    return %arg0, %c0_i32 : i32, i32
  }
  func.func @transform_1(%arg0: i32) -> (i32, i32) {
    %c0_i32 = arith.constant 0 : i32
    %c0_i32_0 = arith.constant 0 : i32
    %c0_i32_1 = arith.constant 0 : i32
    return %c0_i32, %c0_i32_0 : i32, i32
  }
  func.func @transform_2(%arg0: i32) -> (i32, i32) {
    %c0_i32 = arith.constant 0 : i32
    %c0_i32_0 = arith.constant 0 : i32
    %c0_i32_1 = arith.constant 0 : i32
    return %c0_i32, %c0_i32_0 : i32, i32
  }
  func.func @transform_3(%arg0: i32) -> (i32, i32) {
    %c0_i32 = arith.constant 0 : i32
    %c0_i32_0 = arith.constant 0 : i32
    %c0_i32_1 = arith.constant 0 : i32
    return %c0_i32, %c0_i32_0 : i32, i32
  }
  func.func @transform_4(%arg0: i32) -> (i32, i32) {
    %c0_i32 = arith.constant 0 : i32
    %c0_i32_0 = arith.constant 0 : i32
    %c0_i32_1 = arith.constant 0 : i32
    return %c0_i32, %c0_i32_0 : i32, i32
  }
  func.func @transform_5(%arg0: i32) -> (i32, i32) {
    %c0_i32 = arith.constant 0 : i32
    %c0_i32_0 = arith.constant 0 : i32
    return %arg0, %c0_i32 : i32, i32
  }
}

</mosaic_0001>

<llo_original>
// kernel: tpu_custom_call.1
$region0: #{tpu_custom_call.1}
  #allocation0 [shape = 'u32[]', space=smem, size = 0x4, offset = 0x4, fixed_abs, tag = 'smem constant byte address 0x4 - core index']
  #allocation1 [shape = 'u32[144,128]{1,0:T(1,128)}', space=vmem, size = 0x12000, scoped, tag = 'internal scratch']
  %s0 = inlined_call_operand.vmem [shape: f32[8,2], index: 0, kind: input, shape index: {}]
  %s1 = inlined_call_operand.vmem [shape: f32[2,512], index: 1, kind: input, shape index: {}]
  %s2 = inlined_call_operand.hbm [shape: f32[1,512], index: 2, kind: input, shape index: {}]
  %s3 = inlined_call_operand.hbm [shape: bf16[512,896], index: 3, kind: input, shape index: {}]
  %s4 = inlined_call_operand.vmem [shape: f32[1,784], index: 4, kind: input, shape index: {}]
  %s5 = inlined_call_operand.hbm [shape: f32[8,784], index: 5, kind: output, shape index: {}]
  %s6 = sld [smem:[#allocation0]]
  $region38: #{tpu_custom_call.1} parent=0
    _
  %s8 = ssub.s32 1, %s6
  %s9 = scalar_select 0, %s8, %s6
  $region1: #{tpu_custom_call.1} parent=0
    #allocation2 [shape = 'u8[2048]{0}', space=vmem, size = 0x800, scoped, tag = 'input window, operand 2, single buffered']
    #allocation3 [shape = 's32[1]{0}', space=sflag, size = 0x4, scoped, tag = 'scoped memory for tpu_custom_call.1']
    #allocation4 [shape = 's32[1]{0}', space=sflag, size = 0x4, scoped, tag = 'scoped memory for tpu_custom_call.1']
    #allocation5 [shape = 'u8[917504]{0}', space=vmem, size = 0xe0000, scoped, tag = 'input window, operand 3, single buffered']
    #allocation6 [shape = 's32[1]{0}', space=sflag, size = 0x4, scoped, tag = 'scoped memory for tpu_custom_call.1']
    #allocation7 [shape = 'u8[28672]{0}', space=vmem, size = 0x7000, scoped, tag = 'output window, operand 0, single buffered']
    %10 = vsyncpa [#allocation3], 0
    %11 = vsyncpa [#allocation6], 0
    %12 = vsyncpa [#allocation4], 0
    // Predicated region
    $region2: #{tpu_custom_call.1} parent=1 // pred_check
      _
    $region3: #{tpu_custom_call.1} parent=1 // pred_check_branch
      %14 = sbr.rel (0) target = $region5
    $region4: #{tpu_custom_call.1} parent=1 // pred_region
      _
    $region5: #{tpu_custom_call.1} parent=1 // pred_fallthru
      _
    // Predicated region
    $region6: #{tpu_custom_call.1} parent=1 // pred_check
      _
    $region7: #{tpu_custom_call.1} parent=1 // pred_check_branch
      %16 = sbr.rel (0) target = $region9
    $region8: #{tpu_custom_call.1} parent=1 // pred_region
      _
    $region9: #{tpu_custom_call.1} parent=1 // pred_fallthru
      _
    // Predicated region
    $region10: #{tpu_custom_call.1} parent=1 // pred_check
      _
    $region11: #{tpu_custom_call.1} parent=1 // pred_check_branch
      %18 = sbr.rel (0) target = $region13
    $region12: #{tpu_custom_call.1} parent=1 // pred_region
      %s20 = ssub.s32 64, 64
      %21 = vsyncadd [#allocation3], %s20
      %s23 = sshll.u32 [#allocation2], 4
      %s24 = int_to_ptr.vmem [resolvable:$true] %s23
      %26 = dma.hbm_to_vmem [thread:$0]  %s2, 64, %s24, [#allocation3]
    $region13: #{tpu_custom_call.1} parent=1 // pred_fallthru
      _
    // Predicated region
    $region14: #{tpu_custom_call.1} parent=1 // pred_check
      _
    $region15: #{tpu_custom_call.1} parent=1 // pred_check_branch
      %28 = sbr.rel (0) target = $region17
    $region16: #{tpu_custom_call.1} parent=1 // pred_region
      %s30 = ssub.s32 28672, 28672
      %31 = vsyncadd [#allocation6], %s30
      %s32 = sshll.u32 [#allocation5], 4
      %s33 = int_to_ptr.vmem [resolvable:$true] %s32
      %38 = dma.hbm_to_vmem [thread:$0]  %s3, 28672, %s33, [#allocation6], 448, 448, 28
    $region17: #{tpu_custom_call.1} parent=1 // pred_fallthru
      _
    // Predicated region
    $region18: #{tpu_custom_call.1} parent=1 // pred_check
      _
    $region19: #{tpu_custom_call.1} parent=1 // pred_check_branch
      %40 = sbr.rel (0) target = $region21
    $region20: #{tpu_custom_call.1} parent=1 // pred_region
      _
    $region21: #{tpu_custom_call.1} parent=1 // pred_fallthru
      _
    // Predicated region
    $region22: #{tpu_custom_call.1} parent=1 // pred_check
      _
    $region23: #{tpu_custom_call.1} parent=1 // pred_check_branch
      %42 = sbr.rel (0) target = $region25
    $region24: #{tpu_custom_call.1} parent=1 // pred_region
      %43 = dma.done [#allocation3], 64
    $region25: #{tpu_custom_call.1} parent=1 // pred_fallthru
      _
    // Predicated region
    $region26: #{tpu_custom_call.1} parent=1 // pred_check
      _
    $region27: #{tpu_custom_call.1} parent=1 // pred_check_branch
      %45 = sbr.rel (0) target = $region29
    $region28: #{tpu_custom_call.1} parent=1 // pred_region
      %46 = dma.done [#allocation6], 28672
    $region29: #{tpu_custom_call.1} parent=1 // pred_fallthru
      _
    %v48 = vld [vmem:[%s0] sm:$0xff]
    %v49 = vld [vmem:[%s1] sm:$0xff]
    %51 = vset.pattern.permute.xlu0 0
    %52 = vperm.xlu0 %51, %v48
    %v53 = vpop.permute.xlu0 %52
    %v56 = vlaneseq
    %v57 = vshrl.u32 %v56, 7
    %v58 = vsub.s32 0, %v57
    %v59 = vrot.slane %v49, %v58
    %v60 = vlaneseq
    %v61 = vshrl.u32 %v60, 7
    %v62 = vsub.s32 2, %v61
    %v63 = vrot.slane %v49, %v62
    %v64 = vlaneseq
    %v65 = vshrl.u32 %v64, 7
    %v66 = vsub.s32 4, %v65
    %v67 = vrot.slane %v49, %v66
    %v68 = vlaneseq
    %v69 = vshrl.u32 %v68, 7
    %v70 = vsub.s32 6, %v69
    %v71 = vrot.slane %v49, %v70
    %v76 = vlaneseq
    %v77 = vshrl.u32 %v76, 7
    %v78 = vsub.s32 0, %v77
    %v79 = vrot.slane %v59, %v78
    %v80 = vlaneseq
    %v81 = vshrl.u32 %v80, 7
    %v82 = vsub.s32 0, %v81
    %v83 = vrot.slane %v63, %v82
    %v84 = vlaneseq
    %v85 = vshrl.u32 %v84, 7
    %v86 = vsub.s32 0, %v85
    %v87 = vrot.slane %v67, %v86
    %v88 = vlaneseq
    %v89 = vshrl.u32 %v88, 7
    %v90 = vsub.s32 0, %v89
    %v91 = vrot.slane %v71, %v90
    %v92 = vmul.f32 %v53, %v79
    %v93 = vmul.f32 %v53, %v83
    %v94 = vmul.f32 %v53, %v87
    %v95 = vmul.f32 %v53, %v91
    %96 = vset.pattern.permute.xlu0 1
    %97 = vperm.xlu0 %96, %v48
    %v98 = vpop.permute.xlu0 %97
    %v100 = vlaneseq
    %v101 = vshrl.u32 %v100, 7
    %v102 = vsub.s32 1, %v101
    %v103 = vrot.slane %v49, %v102
    %v104 = vlaneseq
    %v105 = vshrl.u32 %v104, 7
    %v106 = vsub.s32 3, %v105
    %v107 = vrot.slane %v49, %v106
    %v108 = vlaneseq
    %v109 = vshrl.u32 %v108, 7
    %v110 = vsub.s32 5, %v109
    %v111 = vrot.slane %v49, %v110
    %v112 = vlaneseq
    %v113 = vshrl.u32 %v112, 7
    %v114 = vsub.s32 7, %v113
    %v115 = vrot.slane %v49, %v114
    %v120 = vlaneseq
    %v121 = vshrl.u32 %v120, 7
    %v122 = vsub.s32 1, %v121
    %v123 = vrot.slane %v103, %v122
    %v124 = vlaneseq
    %v125 = vshrl.u32 %v124, 7
    %v126 = vsub.s32 1, %v125
    %v127 = vrot.slane %v107, %v126
    %v128 = vlaneseq
    %v129 = vshrl.u32 %v128, 7
    %v130 = vsub.s32 1, %v129
    %v131 = vrot.slane %v111, %v130
    %v132 = vlaneseq
    %v133 = vshrl.u32 %v132, 7
    %v134 = vsub.s32 1, %v133
    %v135 = vrot.slane %v115, %v134
    %v136 = vmul.f32 %v98, %v123
    %v137 = vmul.f32 %v98, %v127
    %v138 = vmul.f32 %v98, %v131
    %v139 = vmul.f32 %v98, %v135
    %v140 = vadd.f32 %v92, %v136
    %v141 = vadd.f32 %v93, %v137
    %v142 = vadd.f32 %v94, %v138
    %v143 = vadd.f32 %v95, %v139
    %v144 = vld [vmem:[#allocation2] sm:$0xf]
    %v146 = vlaneseq
    %v147 = vshrl.u32 %v146, 7
    %v148 = vsub.s32 0, %v147
    %v149 = vrot.slane %v144, %v148
    %v150 = vlaneseq
    %v151 = vshrl.u32 %v150, 7
    %v152 = vsub.s32 1, %v151
    %v153 = vrot.slane %v144, %v152
    %v154 = vlaneseq
    %v155 = vshrl.u32 %v154, 7
    %v156 = vsub.s32 2, %v155
    %v157 = vrot.slane %v144, %v156
    %v158 = vlaneseq
    %v159 = vshrl.u32 %v158, 7
    %v160 = vsub.s32 3, %v159
    %v161 = vrot.slane %v144, %v160
    %v166 = vadd.f32 %v140, %v149
    %v167 = vadd.f32 %v141, %v153
    %v168 = vadd.f32 %v142, %v157
    %v169 = vadd.f32 %v143, %v161
    %v170 = vmax.f32 %v166, 0.0
    %v171 = vmax.f32 %v167, 0.0
    %v172 = vmax.f32 %v168, 0.0
    %v173 = vmax.f32 %v169, 0.0
    %v174 = vpack.c.bf16 %v170, %v170
    %v175 = vpack.c.bf16 %v171, %v171
    %v176 = vpack.c.bf16 %v172, %v172
    %v177 = vpack.c.bf16 %v173, %v173
    %v178 = vld [vmem:[#allocation5] sm:$0xff]
    %v179 = vld [vmem:[#allocation5 + $0x8] sm:$0xff]
    %v180 = vld [vmem:[#allocation5 + $0x10] sm:$0xff]
    %v181 = vld [vmem:[#allocation5 + $0x18] sm:$0xf]
    %v182 = vld [vmem:[#allocation5 + $0x1c] sm:$0xff]
    %v183 = vld [vmem:[#allocation5 + $0x24] sm:$0xff]
    %v184 = vld [vmem:[#allocation5 + $0x2c] sm:$0xff]
    %v185 = vld [vmem:[#allocation5 + $0x34] sm:$0xf]
    %v186 = vld [vmem:[#allocation5 + $0x38] sm:$0xff]
    %v187 = vld [vmem:[#allocation5 + $0x40] sm:$0xff]
    %v188 = vld [vmem:[#allocation5 + $0x48] sm:$0xff]
    %v189 = vld [vmem:[#allocation5 + $0x50] sm:$0xf]
    %v190 = vld [vmem:[#allocation5 + $0x54] sm:$0xff]
    %v191 = vld [vmem:[#allocation5 + $0x5c] sm:$0xff]
    %v192 = vld [vmem:[#allocation5 + $0x64] sm:$0xff]
    %v193 = vld [vmem:[#allocation5 + $0x6c] sm:$0xf]
    %v194 = vld [vmem:[#allocation5 + $0x70] sm:$0xff]
    %v195 = vld [vmem:[#allocation5 + $0x78] sm:$0xff]
    %v196 = vld [vmem:[#allocation5 + $0x80] sm:$0xff]
    %v197 = vld [vmem:[#allocation5 + $0x88] sm:$0xf]
    %v198 = vld [vmem:[#allocation5 + $0x8c] sm:$0xff]
    %v199 = vld [vmem:[#allocation5 + $0x94] sm:$0xff]
    %v200 = vld [vmem:[#allocation5 + $0x9c] sm:$0xff]
    %v201 = vld [vmem:[#allocation5 + $0xa4] sm:$0xf]
    %v202 = vld [vmem:[#allocation5 + $0xa8] sm:$0xff]
    %v203 = vld [vmem:[#allocation5 + $0xb0] sm:$0xff]
    %v204 = vld [vmem:[#allocation5 + $0xb8] sm:$0xff]
    %v205 = vld [vmem:[#allocation5 + $0xc0] sm:$0xf]
    %v206 = vld [vmem:[#allocation5 + $0xc4] sm:$0xff]
    %v207 = vld [vmem:[#allocation5 + $0xcc] sm:$0xff]
    %v208 = vld [vmem:[#allocation5 + $0xd4] sm:$0xff]
    %v209 = vld [vmem:[#allocation5 + $0xdc] sm:$0xf]
    %v210 = vld [vmem:[#allocation5 + $0xe0] sm:$0xff]
    %v211 = vld [vmem:[#allocation5 + $0xe8] sm:$0xff]
    %v212 = vld [vmem:[#allocation5 + $0xf0] sm:$0xff]
    %v213 = vld [vmem:[#allocation5 + $0xf8] sm:$0xf]
    %v214 = vld [vmem:[#allocation5 + $0xfc] sm:$0xff]
    %v215 = vld [vmem:[#allocation5 + $0x104] sm:$0xff]
    %v216 = vld [vmem:[#allocation5 + $0x10c] sm:$0xff]
    %v217 = vld [vmem:[#allocation5 + $0x114] sm:$0xf]
    %v218 = vld [vmem:[#allocation5 + $0x118] sm:$0xff]
    %v219 = vld [vmem:[#allocation5 + $0x120] sm:$0xff]
    %v220 = vld [vmem:[#allocation5 + $0x128] sm:$0xff]
    %v221 = vld [vmem:[#allocation5 + $0x130] sm:$0xf]
    %v222 = vld [vmem:[#allocation5 + $0x134] sm:$0xff]
    %v223 = vld [vmem:[#allocation5 + $0x13c] sm:$0xff]
    %v224 = vld [vmem:[#allocation5 + $0x144] sm:$0xff]
    %v225 = vld [vmem:[#allocation5 + $0x14c] sm:$0xf]
    %v226 = vld [vmem:[#allocation5 + $0x150] sm:$0xff]
    %v227 = vld [vmem:[#allocation5 + $0x158] sm:$0xff]
    %v228 = vld [vmem:[#allocation5 + $0x160] sm:$0xff]
    %v229 = vld [vmem:[#allocation5 + $0x168] sm:$0xf]
    %v230 = vld [vmem:[#allocation5 + $0x16c] sm:$0xff]
    %v231 = vld [vmem:[#allocation5 + $0x174] sm:$0xff]
    %v232 = vld [vmem:[#allocation5 + $0x17c] sm:$0xff]
    %v233 = vld [vmem:[#allocation5 + $0x184] sm:$0xf]
    %v234 = vld [vmem:[#allocation5 + $0x188] sm:$0xff]
    %v235 = vld [vmem:[#allocation5 + $0x190] sm:$0xff]
    %v236 = vld [vmem:[#allocation5 + $0x198] sm:$0xff]
    %v237 = vld [vmem:[#allocation5 + $0x1a0] sm:$0xf]
    %v238 = vld [vmem:[#allocation5 + $0x1a4] sm:$0xff]
    %v239 = vld [vmem:[#allocation5 + $0x1ac] sm:$0xff]
    %v240 = vld [vmem:[#allocation5 + $0x1b4] sm:$0xff]
    %v241 = vld [vmem:[#allocation5 + $0x1bc] sm:$0xf]
    %v242 = vld [vmem:[#allocation5 + $0x1c0] sm:$0xff]
    %v243 = vld [vmem:[#allocation5 + $0x1c8] sm:$0xff]
    %v244 = vld [vmem:[#allocation5 + $0x1d0] sm:$0xff]
    %v245 = vld [vmem:[#allocation5 + $0x1d8] sm:$0xf]
    %v246 = vld [vmem:[#allocation5 + $0x1dc] sm:$0xff]
    %v247 = vld [vmem:[#allocation5 + $0x1e4] sm:$0xff]
    %v248 = vld [vmem:[#allocation5 + $0x1ec] sm:$0xff]
    %v249 = vld [vmem:[#allocation5 + $0x1f4] sm:$0xf]
    %v250 = vld [vmem:[#allocation5 + $0x1f8] sm:$0xff]
    %v251 = vld [vmem:[#allocation5 + $0x200] sm:$0xff]
    %v252 = vld [vmem:[#allocation5 + $0x208] sm:$0xff]
    %v253 = vld [vmem:[#allocation5 + $0x210] sm:$0xf]
    %v254 = vld [vmem:[#allocation5 + $0x214] sm:$0xff]
    %v255 = vld [vmem:[#allocation5 + $0x21c] sm:$0xff]
    %v256 = vld [vmem:[#allocation5 + $0x224] sm:$0xff]
    %v257 = vld [vmem:[#allocation5 + $0x22c] sm:$0xf]
    %v258 = vld [vmem:[#allocation5 + $0x230] sm:$0xff]
    %v259 = vld [vmem:[#allocation5 + $0x238] sm:$0xff]
    %v260 = vld [vmem:[#allocation5 + $0x240] sm:$0xff]
    %v261 = vld [vmem:[#allocation5 + $0x248] sm:$0xf]
    %v262 = vld [vmem:[#allocation5 + $0x24c] sm:$0xff]
    %v263 = vld [vmem:[#allocation5 + $0x254] sm:$0xff]
    %v264 = vld [vmem:[#allocation5 + $0x25c] sm:$0xff]
    %v265 = vld [vmem:[#allocation5 + $0x264] sm:$0xf]
    %v266 = vld [vmem:[#allocation5 + $0x268] sm:$0xff]
    %v267 = vld [vmem:[#allocation5 + $0x270] sm:$0xff]
    %v268 = vld [vmem:[#allocation5 + $0x278] sm:$0xff]
    %v269 = vld [vmem:[#allocation5 + $0x280] sm:$0xf]
    %v270 = vld [vmem:[#allocation5 + $0x284] sm:$0xff]
    %v271 = vld [vmem:[#allocation5 + $0x28c] sm:$0xff]
    %v272 = vld [vmem:[#allocation5 + $0x294] sm:$0xff]
    %v273 = vld [vmem:[#allocation5 + $0x29c] sm:$0xf]
    %v274 = vld [vmem:[#allocation5 + $0x2a0] sm:$0xff]
    %v275 = vld [vmem:[#allocation5 + $0x2a8] sm:$0xff]
    %v276 = vld [vmem:[#allocation5 + $0x2b0] sm:$0xff]
    %v277 = vld [vmem:[#allocation5 + $0x2b8] sm:$0xf]
    %v278 = vld [vmem:[#allocation5 + $0x2bc] sm:$0xff]
    %v279 = vld [vmem:[#allocation5 + $0x2c4] sm:$0xff]
    %v280 = vld [vmem:[#allocation5 + $0x2cc] sm:$0xff]
    %v281 = vld [vmem:[#allocation5 + $0x2d4] sm:$0xf]
    %v282 = vld [vmem:[#allocation5 + $0x2d8] sm:$0xff]
    %v283 = vld [vmem:[#allocation5 + $0x2e0] sm:$0xff]
    %v284 = vld [vmem:[#allocation5 + $0x2e8] sm:$0xff]
    %v285 = vld [vmem:[#allocation5 + $0x2f0] sm:$0xf]
    %v286 = vld [vmem:[#allocation5 + $0x2f4] sm:$0xff]
    %v287 = vld [vmem:[#allocation5 + $0x2fc] sm:$0xff]
    %v288 = vld [vmem:[#allocation5 + $0x304] sm:$0xff]
    %v289 = vld [vmem:[#allocation5 + $0x30c] sm:$0xf]
    %v290 = vld [vmem:[#allocation5 + $0x310] sm:$0xff]
    %v291 = vld [vmem:[#allocation5 + $0x318] sm:$0xff]
    %v292 = vld [vmem:[#allocation5 + $0x320] sm:$0xff]
    %v293 = vld [vmem:[#allocation5 + $0x328] sm:$0xf]
    %v294 = vld [vmem:[#allocation5 + $0x32c] sm:$0xff]
    %v295 = vld [vmem:[#allocation5 + $0x334] sm:$0xff]
    %v296 = vld [vmem:[#allocation5 + $0x33c] sm:$0xff]
    %v297 = vld [vmem:[#allocation5 + $0x344] sm:$0xf]
    %v298 = vld [vmem:[#allocation5 + $0x348] sm:$0xff]
    %v299 = vld [vmem:[#allocation5 + $0x350] sm:$0xff]
    %v300 = vld [vmem:[#allocation5 + $0x358] sm:$0xff]
    %v301 = vld [vmem:[#allocation5 + $0x360] sm:$0xf]
    %v302 = vld [vmem:[#allocation5 + $0x364] sm:$0xff]
    %v303 = vld [vmem:[#allocation5 + $0x36c] sm:$0xff]
    %v304 = vld [vmem:[#allocation5 + $0x374] sm:$0xff]
    %v305 = vld [vmem:[#allocation5 + $0x37c] sm:$0xf]
    %v306 = vld [vmem:[#allocation5 + $0x380] sm:$0xff]
    %v307 = vld [vmem:[#allocation5 + $0x388] sm:$0xff]
    %v308 = vld [vmem:[#allocation5 + $0x390] sm:$0xff]
    %v309 = vld [vmem:[#allocation5 + $0x398] sm:$0xf]
    %v310 = vld [vmem:[#allocation5 + $0x39c] sm:$0xff]
    %v311 = vld [vmem:[#allocation5 + $0x3a4] sm:$0xff]
    %v312 = vld [vmem:[#allocation5 + $0x3ac] sm:$0xff]
    %v313 = vld [vmem:[#allocation5 + $0x3b4] sm:$0xf]
    %v314 = vld [vmem:[#allocation5 + $0x3b8] sm:$0xff]
    %v315 = vld [vmem:[#allocation5 + $0x3c0] sm:$0xff]
    %v316 = vld [vmem:[#allocation5 + $0x3c8] sm:$0xff]
    %v317 = vld [vmem:[#allocation5 + $0x3d0] sm:$0xf]
    %v318 = vld [vmem:[#allocation5 + $0x3d4] sm:$0xff]
    %v319 = vld [vmem:[#allocation5 + $0x3dc] sm:$0xff]
    %v320 = vld [vmem:[#allocation5 + $0x3e4] sm:$0xff]
    %v321 = vld [vmem:[#allocation5 + $0x3ec] sm:$0xf]
    %v322 = vld [vmem:[#allocation5 + $0x3f0] sm:$0xff]
    %v323 = vld [vmem:[#allocation5 + $0x3f8] sm:$0xff]
    %v324 = vld [vmem:[#allocation5 + $0x400] sm:$0xff]
    %v325 = vld [vmem:[#allocation5 + $0x408] sm:$0xf]
    %v326 = vld [vmem:[#allocation5 + $0x40c] sm:$0xff]
    %v327 = vld [vmem:[#allocation5 + $0x414] sm:$0xff]
    %v328 = vld [vmem:[#allocation5 + $0x41c] sm:$0xff]
    %v329 = vld [vmem:[#allocation5 + $0x424] sm:$0xf]
    %v330 = vld [vmem:[#allocation5 + $0x428] sm:$0xff]
    %v331 = vld [vmem:[#allocation5 + $0x430] sm:$0xff]
    %v332 = vld [vmem:[#allocation5 + $0x438] sm:$0xff]
    %v333 = vld [vmem:[#allocation5 + $0x440] sm:$0xf]
    %v334 = vld [vmem:[#allocation5 + $0x444] sm:$0xff]
    %v335 = vld [vmem:[#allocation5 + $0x44c] sm:$0xff]
    %v336 = vld [vmem:[#allocation5 + $0x454] sm:$0xff]
    %v337 = vld [vmem:[#allocation5 + $0x45c] sm:$0xf]
    %v338 = vld [vmem:[#allocation5 + $0x460] sm:$0xff]
    %v339 = vld [vmem:[#allocation5 + $0x468] sm:$0xff]
    %v340 = vld [vmem:[#allocation5 + $0x470] sm:$0xff]
    %v341 = vld [vmem:[#allocation5 + $0x478] sm:$0xf]
    %v342 = vld [vmem:[#allocation5 + $0x47c] sm:$0xff]
    %v343 = vld [vmem:[#allocation5 + $0x484] sm:$0xff]
    %v344 = vld [vmem:[#allocation5 + $0x48c] sm:$0xff]
    %v345 = vld [vmem:[#allocation5 + $0x494] sm:$0xf]
    %v346 = vld [vmem:[#allocation5 + $0x498] sm:$0xff]
    %v347 = vld [vmem:[#allocation5 + $0x4a0] sm:$0xff]
    %v348 = vld [vmem:[#allocation5 + $0x4a8] sm:$0xff]
    %v349 = vld [vmem:[#allocation5 + $0x4b0] sm:$0xf]
    %v350 = vld [vmem:[#allocation5 + $0x4b4] sm:$0xff]
    %v351 = vld [vmem:[#allocation5 + $0x4bc] sm:$0xff]
    %v352 = vld [vmem:[#allocation5 + $0x4c4] sm:$0xff]
    %v353 = vld [vmem:[#allocation5 + $0x4cc] sm:$0xf]
    %v354 = vld [vmem:[#allocation5 + $0x4d0] sm:$0xff]
    %v355 = vld [vmem:[#allocation5 + $0x4d8] sm:$0xff]
    %v356 = vld [vmem:[#allocation5 + $0x4e0] sm:$0xff]
    %v357 = vld [vmem:[#allocation5 + $0x4e8] sm:$0xf]
    %v358 = vld [vmem:[#allocation5 + $0x4ec] sm:$0xff]
    %v359 = vld [vmem:[#allocation5 + $0x4f4] sm:$0xff]
    %v360 = vld [vmem:[#allocation5 + $0x4fc] sm:$0xff]
    %v361 = vld [vmem:[#allocation5 + $0x504] sm:$0xf]
    %v362 = vld [vmem:[#allocation5 + $0x508] sm:$0xff]
    %v363 = vld [vmem:[#allocation5 + $0x510] sm:$0xff]
    %v364 = vld [vmem:[#allocation5 + $0x518] sm:$0xff]
    %v365 = vld [vmem:[#allocation5 + $0x520] sm:$0xf]
    %v366 = vld [vmem:[#allocation5 + $0x524] sm:$0xff]
    %v367 = vld [vmem:[#allocation5 + $0x52c] sm:$0xff]
    %v368 = vld [vmem:[#allocation5 + $0x534] sm:$0xff]
    %v369 = vld [vmem:[#allocation5 + $0x53c] sm:$0xf]
    %v370 = vld [vmem:[#allocation5 + $0x540] sm:$0xff]
    %v371 = vld [vmem:[#allocation5 + $0x548] sm:$0xff]
    %v372 = vld [vmem:[#allocation5 + $0x550] sm:$0xff]
    %v373 = vld [vmem:[#allocation5 + $0x558] sm:$0xf]
    %v374 = vld [vmem:[#allocation5 + $0x55c] sm:$0xff]
    %v375 = vld [vmem:[#allocation5 + $0x564] sm:$0xff]
    %v376 = vld [vmem:[#allocation5 + $0x56c] sm:$0xff]
    %v377 = vld [vmem:[#allocation5 + $0x574] sm:$0xf]
    %v378 = vld [vmem:[#allocation5 + $0x578] sm:$0xff]
    %v379 = vld [vmem:[#allocation5 + $0x580] sm:$0xff]
    %v380 = vld [vmem:[#allocation5 + $0x588] sm:$0xff]
    %v381 = vld [vmem:[#allocation5 + $0x590] sm:$0xf]
    %v382 = vld [vmem:[#allocation5 + $0x594] sm:$0xff]
    %v383 = vld [vmem:[#allocation5 + $0x59c] sm:$0xff]
    %v384 = vld [vmem:[#allocation5 + $0x5a4] sm:$0xff]
    %v385 = vld [vmem:[#allocation5 + $0x5ac] sm:$0xf]
    %v386 = vld [vmem:[#allocation5 + $0x5b0] sm:$0xff]
    %v387 = vld [vmem:[#allocation5 + $0x5b8] sm:$0xff]
    %v388 = vld [vmem:[#allocation5 + $0x5c0] sm:$0xff]
    %v389 = vld [vmem:[#allocation5 + $0x5c8] sm:$0xf]
    %v390 = vld [vmem:[#allocation5 + $0x5cc] sm:$0xff]
    %v391 = vld [vmem:[#allocation5 + $0x5d4] sm:$0xff]
    %v392 = vld [vmem:[#allocation5 + $0x5dc] sm:$0xff]
    %v393 = vld [vmem:[#allocation5 + $0x5e4] sm:$0xf]
    %v394 = vld [vmem:[#allocation5 + $0x5e8] sm:$0xff]
    %v395 = vld [vmem:[#allocation5 + $0x5f0] sm:$0xff]
    %v396 = vld [vmem:[#allocation5 + $0x5f8] sm:$0xff]
    %v397 = vld [vmem:[#allocation5 + $0x600] sm:$0xf]
    %v398 = vld [vmem:[#allocation5 + $0x604] sm:$0xff]
    %v399 = vld [vmem:[#allocation5 + $0x60c] sm:$0xff]
    %v400 = vld [vmem:[#allocation5 + $0x614] sm:$0xff]
    %v401 = vld [vmem:[#allocation5 + $0x61c] sm:$0xf]
    %v402 = vld [vmem:[#allocation5 + $0x620] sm:$0xff]
    %v403 = vld [vmem:[#allocation5 + $0x628] sm:$0xff]
    %v404 = vld [vmem:[#allocation5 + $0x630] sm:$0xff]
    %v405 = vld [vmem:[#allocation5 + $0x638] sm:$0xf]
    %v406 = vld [vmem:[#allocation5 + $0x63c] sm:$0xff]
    %v407 = vld [vmem:[#allocation5 + $0x644] sm:$0xff]
    %v408 = vld [vmem:[#allocation5 + $0x64c] sm:$0xff]
    %v409 = vld [vmem:[#allocation5 + $0x654] sm:$0xf]
    %v410 = vld [vmem:[#allocation5 + $0x658] sm:$0xff]
    %v411 = vld [vmem:[#allocation5 + $0x660] sm:$0xff]
    %v412 = vld [vmem:[#allocation5 + $0x668] sm:$0xff]
    %v413 = vld [vmem:[#allocation5 + $0x670] sm:$0xf]
    %v414 = vld [vmem:[#allocation5 + $0x674] sm:$0xff]
    %v415 = vld [vmem:[#allocation5 + $0x67c] sm:$0xff]
    %v416 = vld [vmem:[#allocation5 + $0x684] sm:$0xff]
    %v417 = vld [vmem:[#allocation5 + $0x68c] sm:$0xf]
    %v418 = vld [vmem:[#allocation5 + $0x690] sm:$0xff]
    %v419 = vld [vmem:[#allocation5 + $0x698] sm:$0xff]
    %v420 = vld [vmem:[#allocation5 + $0x6a0] sm:$0xff]
    %v421 = vld [vmem:[#allocation5 + $0x6a8] sm:$0xf]
    %v422 = vld [vmem:[#allocation5 + $0x6ac] sm:$0xff]
    %v423 = vld [vmem:[#allocation5 + $0x6b4] sm:$0xff]
    %v424 = vld [vmem:[#allocation5 + $0x6bc] sm:$0xff]
    %v425 = vld [vmem:[#allocation5 + $0x6c4] sm:$0xf]
    %v426 = vld [vmem:[#allocation5 + $0x6c8] sm:$0xff]
    %v427 = vld [vmem:[#allocation5 + $0x6d0] sm:$0xff]
    %v428 = vld [vmem:[#allocation5 + $0x6d8] sm:$0xff]
    %v429 = vld [vmem:[#allocation5 + $0x6e0] sm:$0xf]
    %v430 = vld [vmem:[#allocation5 + $0x6e4] sm:$0xff]
    %v431 = vld [vmem:[#allocation5 + $0x6ec] sm:$0xff]
    %v432 = vld [vmem:[#allocation5 + $0x6f4] sm:$0xff]
    %v433 = vld [vmem:[#allocation5 + $0x6fc] sm:$0xf]
    %v690 = vunpack.c.l.b16 %v178
    %v691 = vunpack.c.h.b16 %v178
    %v692 = vunpack.c.l.b16 %v179
    %v693 = vunpack.c.h.b16 %v179
    %v694 = vunpack.c.l.b16 %v180
    %v695 = vunpack.c.h.b16 %v180
    %v696 = vunpack.c.l.b16 %v181
    %v697 = vunpack.c.l.b16 %v182
    %v698 = vunpack.c.h.b16 %v182
    %v699 = vunpack.c.l.b16 %v183
    %v700 = vunpack.c.h.b16 %v183
    %v701 = vunpack.c.l.b16 %v184
    %v702 = vunpack.c.h.b16 %v184
    %v703 = vunpack.c.l.b16 %v185
    %v704 = vunpack.c.l.b16 %v186
    %v705 = vunpack.c.h.b16 %v186
    %v706 = vunpack.c.l.b16 %v187
    %v707 = vunpack.c.h.b16 %v187
    %v708 = vunpack.c.l.b16 %v188
    %v709 = vunpack.c.h.b16 %v188
    %v710 = vunpack.c.l.b16 %v189
    %v711 = vunpack.c.l.b16 %v190
    %v712 = vunpack.c.h.b16 %v190
    %v713 = vunpack.c.l.b16 %v191
    %v714 = vunpack.c.h.b16 %v191
    %v715 = vunpack.c.l.b16 %v192
    %v716 = vunpack.c.h.b16 %v192
    %v717 = vunpack.c.l.b16 %v193
    %v718 = vunpack.c.l.b16 %v194
    %v719 = vunpack.c.h.b16 %v194
    %v720 = vunpack.c.l.b16 %v195
    %v721 = vunpack.c.h.b16 %v195
    %v722 = vunpack.c.l.b16 %v196
    %v723 = vunpack.c.h.b16 %v196
    %v724 = vunpack.c.l.b16 %v197
    %v725 = vunpack.c.l.b16 %v198
    %v726 = vunpack.c.h.b16 %v198
    %v727 = vunpack.c.l.b16 %v199
    %v728 = vunpack.c.h.b16 %v199
    %v729 = vunpack.c.l.b16 %v200
    %v730 = vunpack.c.h.b16 %v200
    %v731 = vunpack.c.l.b16 %v201
    %v732 = vunpack.c.l.b16 %v202
    %v733 = vunpack.c.h.b16 %v202
    %v734 = vunpack.c.l.b16 %v203
    %v735 = vunpack.c.h.b16 %v203
    %v736 = vunpack.c.l.b16 %v204
    %v737 = vunpack.c.h.b16 %v204
    %v738 = vunpack.c.l.b16 %v205
    %v739 = vunpack.c.l.b16 %v206
    %v740 = vunpack.c.h.b16 %v206
    %v741 = vunpack.c.l.b16 %v207
    %v742 = vunpack.c.h.b16 %v207
    %v743 = vunpack.c.l.b16 %v208
    %v744 = vunpack.c.h.b16 %v208
    %v745 = vunpack.c.l.b16 %v209
    %v746 = vunpack.c.l.b16 %v210
    %v747 = vunpack.c.h.b16 %v210
    %v748 = vunpack.c.l.b16 %v211
    %v749 = vunpack.c.h.b16 %v211
    %v750 = vunpack.c.l.b16 %v212
    %v751 = vunpack.c.h.b16 %v212
    %v752 = vunpack.c.l.b16 %v213
    %v753 = vunpack.c.l.b16 %v214
    %v754 = vunpack.c.h.b16 %v214
    %v755 = vunpack.c.l.b16 %v215
    %v756 = vunpack.c.h.b16 %v215
    %v757 = vunpack.c.l.b16 %v216
    %v758 = vunpack.c.h.b16 %v216
    %v759 = vunpack.c.l.b16 %v217
    %v760 = vunpack.c.l.b16 %v218
    %v761 = vunpack.c.h.b16 %v218
    %v762 = vunpack.c.l.b16 %v219
    %v763 = vunpack.c.h.b16 %v219
    %v764 = vunpack.c.l.b16 %v220
    %v765 = vunpack.c.h.b16 %v220
    %v766 = vunpack.c.l.b16 %v221
    %v767 = vunpack.c.l.b16 %v222
    %v768 = vunpack.c.h.b16 %v222
    %v769 = vunpack.c.l.b16 %v223
    %v770 = vunpack.c.h.b16 %v223
    %v771 = vunpack.c.l.b16 %v224
    %v772 = vunpack.c.h.b16 %v224
    %v773 = vunpack.c.l.b16 %v225
    %v774 = vunpack.c.l.b16 %v226
    %v775 = vunpack.c.h.b16 %v226
    %v776 = vunpack.c.l.b16 %v227
    %v777 = vunpack.c.h.b16 %v227
    %v778 = vunpack.c.l.b16 %v228
    %v779 = vunpack.c.h.b16 %v228
    %v780 = vunpack.c.l.b16 %v229
    %v781 = vunpack.c.l.b16 %v230
    %v782 = vunpack.c.h.b16 %v230
    %v783 = vunpack.c.l.b16 %v231
    %v784 = vunpack.c.h.b16 %v231
    %v785 = vunpack.c.l.b16 %v232
    %v786 = vunpack.c.h.b16 %v232
    %v787 = vunpack.c.l.b16 %v233
    %v788 = vunpack.c.l.b16 %v234
    %v789 = vunpack.c.h.b16 %v234
    %v790 = vunpack.c.l.b16 %v235
    %v791 = vunpack.c.h.b16 %v235
    %v792 = vunpack.c.l.b16 %v236
    %v793 = vunpack.c.h.b16 %v236
    %v794 = vunpack.c.l.b16 %v237
    %v795 = vunpack.c.l.b16 %v238
    %v796 = vunpack.c.h.b16 %v238
    %v797 = vunpack.c.l.b16 %v239
    %v798 = vunpack.c.h.b16 %v239
    %v799 = vunpack.c.l.b16 %v240
    %v800 = vunpack.c.h.b16 %v240
    %v801 = vunpack.c.l.b16 %v241
    %v802 = vunpack.c.l.b16 %v242
    %v803 = vunpack.c.h.b16 %v242
    %v804 = vunpack.c.l.b16 %v243
    %v805 = vunpack.c.h.b16 %v243
    %v806 = vunpack.c.l.b16 %v244
    %v807 = vunpack.c.h.b16 %v244
    %v808 = vunpack.c.l.b16 %v245
    %v809 = vunpack.c.l.b16 %v246
    %v810 = vunpack.c.h.b16 %v246
    %v811 = vunpack.c.l.b16 %v247
    %v812 = vunpack.c.h.b16 %v247
    %v813 = vunpack.c.l.b16 %v248
    %v814 = vunpack.c.h.b16 %v248
    %v815 = vunpack.c.l.b16 %v249
    %v816 = vunpack.c.l.b16 %v250
    %v817 = vunpack.c.h.b16 %v250
    %v818 = vunpack.c.l.b16 %v251
    %v819 = vunpack.c.h.b16 %v251
    %v820 = vunpack.c.l.b16 %v252
    %v821 = vunpack.c.h.b16 %v252
    %v822 = vunpack.c.l.b16 %v253
    %v823 = vunpack.c.l.b16 %v254
    %v824 = vunpack.c.h.b16 %v254
    %v825 = vunpack.c.l.b16 %v255
    %v826 = vunpack.c.h.b16 %v255
    %v827 = vunpack.c.l.b16 %v256
    %v828 = vunpack.c.h.b16 %v256
    %v829 = vunpack.c.l.b16 %v257
    %v830 = vunpack.c.l.b16 %v258
    %v831 = vunpack.c.h.b16 %v258
    %v832 = vunpack.c.l.b16 %v259
    %v833 = vunpack.c.h.b16 %v259
    %v834 = vunpack.c.l.b16 %v260
    %v835 = vunpack.c.h.b16 %v260
    %v836 = vunpack.c.l.b16 %v261
    %v837 = vunpack.c.l.b16 %v262
    %v838 = vunpack.c.h.b16 %v262
    %v839 = vunpack.c.l.b16 %v263
    %v840 = vunpack.c.h.b16 %v263
    %v841 = vunpack.c.l.b16 %v264
    %v842 = vunpack.c.h.b16 %v264
    %v843 = vunpack.c.l.b16 %v265
    %v844 = vunpack.c.l.b16 %v266
    %v845 = vunpack.c.h.b16 %v266
    %v846 = vunpack.c.l.b16 %v267
    %v847 = vunpack.c.h.b16 %v267
    %v848 = vunpack.c.l.b16 %v268
    %v849 = vunpack.c.h.b16 %v268
    %v850 = vunpack.c.l.b16 %v269
    %v851 = vunpack.c.l.b16 %v270
    %v852 = vunpack.c.h.b16 %v270
    %v853 = vunpack.c.l.b16 %v271
    %v854 = vunpack.c.h.b16 %v271
    %v855 = vunpack.c.l.b16 %v272
    %v856 = vunpack.c.h.b16 %v272
    %v857 = vunpack.c.l.b16 %v273
    %v858 = vunpack.c.l.b16 %v274
    %v859 = vunpack.c.h.b16 %v274
    %v860 = vunpack.c.l.b16 %v275
    %v861 = vunpack.c.h.b16 %v275
    %v862 = vunpack.c.l.b16 %v276
    %v863 = vunpack.c.h.b16 %v276
    %v864 = vunpack.c.l.b16 %v277
    %v865 = vunpack.c.l.b16 %v278
    %v866 = vunpack.c.h.b16 %v278
    %v867 = vunpack.c.l.b16 %v279
    %v868 = vunpack.c.h.b16 %v279
    %v869 = vunpack.c.l.b16 %v280
    %v870 = vunpack.c.h.b16 %v280
    %v871 = vunpack.c.l.b16 %v281
    %v872 = vunpack.c.l.b16 %v282
    %v873 = vunpack.c.h.b16 %v282
    %v874 = vunpack.c.l.b16 %v283
    %v875 = vunpack.c.h.b16 %v283
    %v876 = vunpack.c.l.b16 %v284
    %v877 = vunpack.c.h.b16 %v284
    %v878 = vunpack.c.l.b16 %v285
    %v879 = vunpack.c.l.b16 %v286
    %v880 = vunpack.c.h.b16 %v286
    %v881 = vunpack.c.l.b16 %v287
    %v882 = vunpack.c.h.b16 %v287
    %v883 = vunpack.c.l.b16 %v288
    %v884 = vunpack.c.h.b16 %v288
    %v885 = vunpack.c.l.b16 %v289
    %v886 = vunpack.c.l.b16 %v290
    %v887 = vunpack.c.h.b16 %v290
    %v888 = vunpack.c.l.b16 %v291
    %v889 = vunpack.c.h.b16 %v291
    %v890 = vunpack.c.l.b16 %v292
    %v891 = vunpack.c.h.b16 %v292
    %v892 = vunpack.c.l.b16 %v293
    %v893 = vunpack.c.l.b16 %v294
    %v894 = vunpack.c.h.b16 %v294
    %v895 = vunpack.c.l.b16 %v295
    %v896 = vunpack.c.h.b16 %v295
    %v897 = vunpack.c.l.b16 %v296
    %v898 = vunpack.c.h.b16 %v296
    %v899 = vunpack.c.l.b16 %v297
    %v900 = vunpack.c.l.b16 %v298
    %v901 = vunpack.c.h.b16 %v298
    %v902 = vunpack.c.l.b16 %v299
    %v903 = vunpack.c.h.b16 %v299
    %v904 = vunpack.c.l.b16 %v300
    %v905 = vunpack.c.h.b16 %v300
    %v906 = vunpack.c.l.b16 %v301
    %v907 = vunpack.c.l.b16 %v302
    %v908 = vunpack.c.h.b16 %v302
    %v909 = vunpack.c.l.b16 %v303
    %v910 = vunpack.c.h.b16 %v303
    %v911 = vunpack.c.l.b16 %v304
    %v912 = vunpack.c.h.b16 %v304
    %v913 = vunpack.c.l.b16 %v305
    %v914 = vunpack.c.l.b16 %v306
    %v915 = vunpack.c.h.b16 %v306
    %v916 = vunpack.c.l.b16 %v307
    %v917 = vunpack.c.h.b16 %v307
    %v918 = vunpack.c.l.b16 %v308
    %v919 = vunpack.c.h.b16 %v308
    %v920 = vunpack.c.l.b16 %v309
    %v921 = vunpack.c.l.b16 %v310
    %v922 = vunpack.c.h.b16 %v310
    %v923 = vunpack.c.l.b16 %v311
    %v924 = vunpack.c.h.b16 %v311
    %v925 = vunpack.c.l.b16 %v312
    %v926 = vunpack.c.h.b16 %v312
    %v927 = vunpack.c.l.b16 %v313
    %v928 = vunpack.c.l.b16 %v314
    %v929 = vunpack.c.h.b16 %v314
    %v930 = vunpack.c.l.b16 %v315
    %v931 = vunpack.c.h.b16 %v315
    %v932 = vunpack.c.l.b16 %v316
    %v933 = vunpack.c.h.b16 %v316
    %v934 = vunpack.c.l.b16 %v317
    %v935 = vunpack.c.l.b16 %v318
    %v936 = vunpack.c.h.b16 %v318
    %v937 = vunpack.c.l.b16 %v319
    %v938 = vunpack.c.h.b16 %v319
    %v939 = vunpack.c.l.b16 %v320
    %v940 = vunpack.c.h.b16 %v320
    %v941 = vunpack.c.l.b16 %v321
    %v942 = vunpack.c.l.b16 %v322
    %v943 = vunpack.c.h.b16 %v322
    %v944 = vunpack.c.l.b16 %v323
    %v945 = vunpack.c.h.b16 %v323
    %v946 = vunpack.c.l.b16 %v324
    %v947 = vunpack.c.h.b16 %v324
    %v948 = vunpack.c.l.b16 %v325
    %v949 = vunpack.c.l.b16 %v326
    %v950 = vunpack.c.h.b16 %v326
    %v951 = vunpack.c.l.b16 %v327
    %v952 = vunpack.c.h.b16 %v327
    %v953 = vunpack.c.l.b16 %v328
    %v954 = vunpack.c.h.b16 %v328
    %v955 = vunpack.c.l.b16 %v329
    %v956 = vunpack.c.l.b16 %v330
    %v957 = vunpack.c.h.b16 %v330
    %v958 = vunpack.c.l.b16 %v331
    %v959 = vunpack.c.h.b16 %v331
    %v960 = vunpack.c.l.b16 %v332
    %v961 = vunpack.c.h.b16 %v332
    %v962 = vunpack.c.l.b16 %v333
    %v963 = vunpack.c.l.b16 %v334
    %v964 = vunpack.c.h.b16 %v334
    %v965 = vunpack.c.l.b16 %v335
    %v966 = vunpack.c.h.b16 %v335
    %v967 = vunpack.c.l.b16 %v336
    %v968 = vunpack.c.h.b16 %v336
    %v969 = vunpack.c.l.b16 %v337
    %v970 = vunpack.c.l.b16 %v338
    %v971 = vunpack.c.h.b16 %v338
    %v972 = vunpack.c.l.b16 %v339
    %v973 = vunpack.c.h.b16 %v339
    %v974 = vunpack.c.l.b16 %v340
    %v975 = vunpack.c.h.b16 %v340
    %v976 = vunpack.c.l.b16 %v341
    %v977 = vunpack.c.l.b16 %v342
    %v978 = vunpack.c.h.b16 %v342
    %v979 = vunpack.c.l.b16 %v343
    %v980 = vunpack.c.h.b16 %v343
    %v981 = vunpack.c.l.b16 %v344
    %v982 = vunpack.c.h.b16 %v344
    %v983 = vunpack.c.l.b16 %v345
    %v984 = vunpack.c.l.b16 %v346
    %v985 = vunpack.c.h.b16 %v346
    %v986 = vunpack.c.l.b16 %v347
    %v987 = vunpack.c.h.b16 %v347
    %v988 = vunpack.c.l.b16 %v348
    %v989 = vunpack.c.h.b16 %v348
    %v990 = vunpack.c.l.b16 %v349
    %v991 = vunpack.c.l.b16 %v350
    %v992 = vunpack.c.h.b16 %v350
    %v993 = vunpack.c.l.b16 %v351
    %v994 = vunpack.c.h.b16 %v351
    %v995 = vunpack.c.l.b16 %v352
    %v996 = vunpack.c.h.b16 %v352
    %v997 = vunpack.c.l.b16 %v353
    %v998 = vunpack.c.l.b16 %v354
    %v999 = vunpack.c.h.b16 %v354
    %v1000 = vunpack.c.l.b16 %v355
    %v1001 = vunpack.c.h.b16 %v355
    %v1002 = vunpack.c.l.b16 %v356
    %v1003 = vunpack.c.h.b16 %v356
    %v1004 = vunpack.c.l.b16 %v357
    %v1005 = vunpack.c.l.b16 %v358
    %v1006 = vunpack.c.h.b16 %v358
    %v1007 = vunpack.c.l.b16 %v359
    %v1008 = vunpack.c.h.b16 %v359
    %v1009 = vunpack.c.l.b16 %v360
    %v1010 = vunpack.c.h.b16 %v360
    %v1011 = vunpack.c.l.b16 %v361
    %v1012 = vunpack.c.l.b16 %v362
    %v1013 = vunpack.c.h.b16 %v362
    %v1014 = vunpack.c.l.b16 %v363
    %v1015 = vunpack.c.h.b16 %v363
    %v1016 = vunpack.c.l.b16 %v364
    %v1017 = vunpack.c.h.b16 %v364
    %v1018 = vunpack.c.l.b16 %v365
    %v1019 = vunpack.c.l.b16 %v366
    %v1020 = vunpack.c.h.b16 %v366
    %v1021 = vunpack.c.l.b16 %v367
    %v1022 = vunpack.c.h.b16 %v367
    %v1023 = vunpack.c.l.b16 %v368
    %v1024 = vunpack.c.h.b16 %v368
    %v1025 = vunpack.c.l.b16 %v369
    %v1026 = vunpack.c.l.b16 %v370
    %v1027 = vunpack.c.h.b16 %v370
    %v1028 = vunpack.c.l.b16 %v371
    %v1029 = vunpack.c.h.b16 %v371
    %v1030 = vunpack.c.l.b16 %v372
    %v1031 = vunpack.c.h.b16 %v372
    %v1032 = vunpack.c.l.b16 %v373
    %v1033 = vunpack.c.l.b16 %v374
    %v1034 = vunpack.c.h.b16 %v374
    %v1035 = vunpack.c.l.b16 %v375
    %v1036 = vunpack.c.h.b16 %v375
    %v1037 = vunpack.c.l.b16 %v376
    %v1038 = vunpack.c.h.b16 %v376
    %v1039 = vunpack.c.l.b16 %v377
    %v1040 = vunpack.c.l.b16 %v378
    %v1041 = vunpack.c.h.b16 %v378
    %v1042 = vunpack.c.l.b16 %v379
    %v1043 = vunpack.c.h.b16 %v379
    %v1044 = vunpack.c.l.b16 %v380
    %v1045 = vunpack.c.h.b16 %v380
    %v1046 = vunpack.c.l.b16 %v381
    %v1047 = vunpack.c.l.b16 %v382
    %v1048 = vunpack.c.h.b16 %v382
    %v1049 = vunpack.c.l.b16 %v383
    %v1050 = vunpack.c.h.b16 %v383
    %v1051 = vunpack.c.l.b16 %v384
    %v1052 = vunpack.c.h.b16 %v384
    %v1053 = vunpack.c.l.b16 %v385
    %v1054 = vunpack.c.l.b16 %v386
    %v1055 = vunpack.c.h.b16 %v386
    %v1056 = vunpack.c.l.b16 %v387
    %v1057 = vunpack.c.h.b16 %v387
    %v1058 = vunpack.c.l.b16 %v388
    %v1059 = vunpack.c.h.b16 %v388
    %v1060 = vunpack.c.l.b16 %v389
    %v1061 = vunpack.c.l.b16 %v390
    %v1062 = vunpack.c.h.b16 %v390
    %v1063 = vunpack.c.l.b16 %v391
    %v1064 = vunpack.c.h.b16 %v391
    %v1065 = vunpack.c.l.b16 %v392
    %v1066 = vunpack.c.h.b16 %v392
    %v1067 = vunpack.c.l.b16 %v393
    %v1068 = vunpack.c.l.b16 %v394
    %v1069 = vunpack.c.h.b16 %v394
    %v1070 = vunpack.c.l.b16 %v395
    %v1071 = vunpack.c.h.b16 %v395
    %v1072 = vunpack.c.l.b16 %v396
    %v1073 = vunpack.c.h.b16 %v396
    %v1074 = vunpack.c.l.b16 %v397
    %v1075 = vunpack.c.l.b16 %v398
    %v1076 = vunpack.c.h.b16 %v398
    %v1077 = vunpack.c.l.b16 %v399
    %v1078 = vunpack.c.h.b16 %v399
    %v1079 = vunpack.c.l.b16 %v400
    %v1080 = vunpack.c.h.b16 %v400
    %v1081 = vunpack.c.l.b16 %v401
    %v1082 = vunpack.c.l.b16 %v402
    %v1083 = vunpack.c.h.b16 %v402
    %v1084 = vunpack.c.l.b16 %v403
    %v1085 = vunpack.c.h.b16 %v403
    %v1086 = vunpack.c.l.b16 %v404
    %v1087 = vunpack.c.h.b16 %v404
    %v1088 = vunpack.c.l.b16 %v405
    %v1089 = vunpack.c.l.b16 %v406
    %v1090 = vunpack.c.h.b16 %v406
    %v1091 = vunpack.c.l.b16 %v407
    %v1092 = vunpack.c.h.b16 %v407
    %v1093 = vunpack.c.l.b16 %v408
    %v1094 = vunpack.c.h.b16 %v408
    %v1095 = vunpack.c.l.b16 %v409
    %v1096 = vunpack.c.l.b16 %v410
    %v1097 = vunpack.c.h.b16 %v410
    %v1098 = vunpack.c.l.b16 %v411
    %v1099 = vunpack.c.h.b16 %v411
    %v1100 = vunpack.c.l.b16 %v412
    %v1101 = vunpack.c.h.b16 %v412
    %v1102 = vunpack.c.l.b16 %v413
    %v1103 = vunpack.c.l.b16 %v414
    %v1104 = vunpack.c.h.b16 %v414
    %v1105 = vunpack.c.l.b16 %v415
    %v1106 = vunpack.c.h.b16 %v415
    %v1107 = vunpack.c.l.b16 %v416
    %v1108 = vunpack.c.h.b16 %v416
    %v1109 = vunpack.c.l.b16 %v417
    %v1110 = vunpack.c.l.b16 %v418
    %v1111 = vunpack.c.h.b16 %v418
    %v1112 = vunpack.c.l.b16 %v419
    %v1113 = vunpack.c.h.b16 %v419
    %v1114 = vunpack.c.l.b16 %v420
    %v1115 = vunpack.c.h.b16 %v420
    %v1116 = vunpack.c.l.b16 %v421
    %v1117 = vunpack.c.l.b16 %v422
    %v1118 = vunpack.c.h.b16 %v422
    %v1119 = vunpack.c.l.b16 %v423
    %v1120 = vunpack.c.h.b16 %v423
    %v1121 = vunpack.c.l.b16 %v424
    %v1122 = vunpack.c.h.b16 %v424
    %v1123 = vunpack.c.l.b16 %v425
    %v1124 = vunpack.c.l.b16 %v426
    %v1125 = vunpack.c.h.b16 %v426
    %v1126 = vunpack.c.l.b16 %v427
    %v1127 = vunpack.c.h.b16 %v427
    %v1128 = vunpack.c.l.b16 %v428
    %v1129 = vunpack.c.h.b16 %v428
    %v1130 = vunpack.c.l.b16 %v429
    %v1131 = vunpack.c.l.b16 %v430
    %v1132 = vunpack.c.h.b16 %v430
    %v1133 = vunpack.c.l.b16 %v431
    %v1134 = vunpack.c.h.b16 %v431
    %v1135 = vunpack.c.l.b16 %v432
    %v1136 = vunpack.c.h.b16 %v432
    %v1137 = vunpack.c.l.b16 %v433
    %v1138 = vpack.c.b16 %v697, %v690
    %v1139 = vpack.c.b16 %v698, %v691
    %v1140 = vpack.c.b16 %v699, %v692
    %v1141 = vpack.c.b16 %v700, %v693
    %v1142 = vpack.c.b16 %v701, %v694
    %v1143 = vpack.c.b16 %v702, %v695
    %v1144 = vpack.c.b16 %v703, %v696
    %v1145 = vpack.c.b16 %v711, %v704
    %v1146 = vpack.c.b16 %v712, %v705
    %v1147 = vpack.c.b16 %v713, %v706
    %v1148 = vpack.c.b16 %v714, %v707
    %v1149 = vpack.c.b16 %v715, %v708
    %v1150 = vpack.c.b16 %v716, %v709
    %v1151 = vpack.c.b16 %v717, %v710
    %v1152 = vpack.c.b16 %v725, %v718
    %v1153 = vpack.c.b16 %v726, %v719
    %v1154 = vpack.c.b16 %v727, %v720
    %v1155 = vpack.c.b16 %v728, %v721
    %v1156 = vpack.c.b16 %v729, %v722
    %v1157 = vpack.c.b16 %v730, %v723
    %v1158 = vpack.c.b16 %v731, %v724
    %v1159 = vpack.c.b16 %v739, %v732
    %v1160 = vpack.c.b16 %v740, %v733
    %v1161 = vpack.c.b16 %v741, %v734
    %v1162 = vpack.c.b16 %v742, %v735
    %v1163 = vpack.c.b16 %v743, %v736
    %v1164 = vpack.c.b16 %v744, %v737
    %v1165 = vpack.c.b16 %v745, %v738
    %v1166 = vpack.c.b16 %v753, %v746
    %v1167 = vpack.c.b16 %v754, %v747
    %v1168 = vpack.c.b16 %v755, %v748
    %v1169 = vpack.c.b16 %v756, %v749
    %v1170 = vpack.c.b16 %v757, %v750
    %v1171 = vpack.c.b16 %v758, %v751
    %v1172 = vpack.c.b16 %v759, %v752
    %v1173 = vpack.c.b16 %v767, %v760
    %v1174 = vpack.c.b16 %v768, %v761
    %v1175 = vpack.c.b16 %v769, %v762
    %v1176 = vpack.c.b16 %v770, %v763
    %v1177 = vpack.c.b16 %v771, %v764
    %v1178 = vpack.c.b16 %v772, %v765
    %v1179 = vpack.c.b16 %v773, %v766
    %v1180 = vpack.c.b16 %v781, %v774
    %v1181 = vpack.c.b16 %v782, %v775
    %v1182 = vpack.c.b16 %v783, %v776
    %v1183 = vpack.c.b16 %v784, %v777
    %v1184 = vpack.c.b16 %v785, %v778
    %v1185 = vpack.c.b16 %v786, %v779
    %v1186 = vpack.c.b16 %v787, %v780
    %v1187 = vpack.c.b16 %v795, %v788
    %v1188 = vpack.c.b16 %v796, %v789
    %v1189 = vpack.c.b16 %v797, %v790
    %v1190 = vpack.c.b16 %v798, %v791
    %v1191 = vpack.c.b16 %v799, %v792
    %v1192 = vpack.c.b16 %v800, %v793
    %v1193 = vpack.c.b16 %v801, %v794
    %v1194 = vpack.c.b16 %v809, %v802
    %v1195 = vpack.c.b16 %v810, %v803
    %v1196 = vpack.c.b16 %v811, %v804
    %v1197 = vpack.c.b16 %v812, %v805
    %v1198 = vpack.c.b16 %v813, %v806
    %v1199 = vpack.c.b16 %v814, %v807
    %v1200 = vpack.c.b16 %v815, %v808
    %v1201 = vpack.c.b16 %v823, %v816
    %v1202 = vpack.c.b16 %v824, %v817
    %v1203 = vpack.c.b16 %v825, %v818
    %v1204 = vpack.c.b16 %v826, %v819
    %v1205 = vpack.c.b16 %v827, %v820
    %v1206 = vpack.c.b16 %v828, %v821
    %v1207 = vpack.c.b16 %v829, %v822
    %v1208 = vpack.c.b16 %v837, %v830
    %v1209 = vpack.c.b16 %v838, %v831
    %v1210 = vpack.c.b16 %v839, %v832
    %v1211 = vpack.c.b16 %v840, %v833
    %v1212 = vpack.c.b16 %v841, %v834
    %v1213 = vpack.c.b16 %v842, %v835
    %v1214 = vpack.c.b16 %v843, %v836
    %v1215 = vpack.c.b16 %v851, %v844
    %v1216 = vpack.c.b16 %v852, %v845
    %v1217 = vpack.c.b16 %v853, %v846
    %v1218 = vpack.c.b16 %v854, %v847
    %v1219 = vpack.c.b16 %v855, %v848
    %v1220 = vpack.c.b16 %v856, %v849
    %v1221 = vpack.c.b16 %v857, %v850
    %v1222 = vpack.c.b16 %v865, %v858
    %v1223 = vpack.c.b16 %v866, %v859
    %v1224 = vpack.c.b16 %v867, %v860
    %v1225 = vpack.c.b16 %v868, %v861
    %v1226 = vpack.c.b16 %v869, %v862
    %v1227 = vpack.c.b16 %v870, %v863
    %v1228 = vpack.c.b16 %v871, %v864
    %v1229 = vpack.c.b16 %v879, %v872
    %v1230 = vpack.c.b16 %v880, %v873
    %v1231 = vpack.c.b16 %v881, %v874
    %v1232 = vpack.c.b16 %v882, %v875
    %v1233 = vpack.c.b16 %v883, %v876
    %v1234 = vpack.c.b16 %v884, %v877
    %v1235 = vpack.c.b16 %v885, %v878
    %v1236 = vpack.c.b16 %v893, %v886
    %v1237 = vpack.c.b16 %v894, %v887
    %v1238 = vpack.c.b16 %v895, %v888
    %v1239 = vpack.c.b16 %v896, %v889
    %v1240 = vpack.c.b16 %v897, %v890
    %v1241 = vpack.c.b16 %v898, %v891
    %v1242 = vpack.c.b16 %v899, %v892
    %v1243 = vpack.c.b16 %v907, %v900
    %v1244 = vpack.c.b16 %v908, %v901
    %v1245 = vpack.c.b16 %v909, %v902
    %v1246 = vpack.c.b16 %v910, %v903
    %v1247 = vpack.c.b16 %v911, %v904
    %v1248 = vpack.c.b16 %v912, %v905
    %v1249 = vpack.c.b16 %v913, %v906
    %v1250 = vpack.c.b16 %v921, %v914
    %v1251 = vpack.c.b16 %v922, %v915
    %v1252 = vpack.c.b16 %v923, %v916
    %v1253 = vpack.c.b16 %v924, %v917
    %v1254 = vpack.c.b16 %v925, %v918
    %v1255 = vpack.c.b16 %v926, %v919
    %v1256 = vpack.c.b16 %v927, %v920
    %v1257 = vpack.c.b16 %v935, %v928
    %v1258 = vpack.c.b16 %v936, %v929
    %v1259 = vpack.c.b16 %v937, %v930
    %v1260 = vpack.c.b16 %v938, %v931
    %v1261 = vpack.c.b16 %v939, %v932
    %v1262 = vpack.c.b16 %v940, %v933
    %v1263 = vpack.c.b16 %v941, %v934
    %v1264 = vpack.c.b16 %v949, %v942
    %v1265 = vpack.c.b16 %v950, %v943
    %v1266 = vpack.c.b16 %v951, %v944
    %v1267 = vpack.c.b16 %v952, %v945
    %v1268 = vpack.c.b16 %v953, %v946
    %v1269 = vpack.c.b16 %v954, %v947
    %v1270 = vpack.c.b16 %v955, %v948
    %v1271 = vpack.c.b16 %v963, %v956
    %v1272 = vpack.c.b16 %v964, %v957
    %v1273 = vpack.c.b16 %v965, %v958
    %v1274 = vpack.c.b16 %v966, %v959
    %v1275 = vpack.c.b16 %v967, %v960
    %v1276 = vpack.c.b16 %v968, %v961
    %v1277 = vpack.c.b16 %v969, %v962
    %v1278 = vpack.c.b16 %v977, %v970
    %v1279 = vpack.c.b16 %v978, %v971
    %v1280 = vpack.c.b16 %v979, %v972
    %v1281 = vpack.c.b16 %v980, %v973
    %v1282 = vpack.c.b16 %v981, %v974
    %v1283 = vpack.c.b16 %v982, %v975
    %v1284 = vpack.c.b16 %v983, %v976
    %v1285 = vpack.c.b16 %v991, %v984
    %v1286 = vpack.c.b16 %v992, %v985
    %v1287 = vpack.c.b16 %v993, %v986
    %v1288 = vpack.c.b16 %v994, %v987
    %v1289 = vpack.c.b16 %v995, %v988
    %v1290 = vpack.c.b16 %v996, %v989
    %v1291 = vpack.c.b16 %v997, %v990
    %v1292 = vpack.c.b16 %v1005, %v998
    %v1293 = vpack.c.b16 %v1006, %v999
    %v1294 = vpack.c.b16 %v1007, %v1000
    %v1295 = vpack.c.b16 %v1008, %v1001
    %v1296 = vpack.c.b16 %v1009, %v1002
    %v1297 = vpack.c.b16 %v1010, %v1003
    %v1298 = vpack.c.b16 %v1011, %v1004
    %v1299 = vpack.c.b16 %v1019, %v1012
    %v1300 = vpack.c.b16 %v1020, %v1013
    %v1301 = vpack.c.b16 %v1021, %v1014
    %v1302 = vpack.c.b16 %v1022, %v1015
    %v1303 = vpack.c.b16 %v1023, %v1016
    %v1304 = vpack.c.b16 %v1024, %v1017
    %v1305 = vpack.c.b16 %v1025, %v1018
    %v1306 = vpack.c.b16 %v1033, %v1026
    %v1307 = vpack.c.b16 %v1034, %v1027
    %v1308 = vpack.c.b16 %v1035, %v1028
    %v1309 = vpack.c.b16 %v1036, %v1029
    %v1310 = vpack.c.b16 %v1037, %v1030
    %v1311 = vpack.c.b16 %v1038, %v1031
    %v1312 = vpack.c.b16 %v1039, %v1032
    %v1313 = vpack.c.b16 %v1047, %v1040
    %v1314 = vpack.c.b16 %v1048, %v1041
    %v1315 = vpack.c.b16 %v1049, %v1042
    %v1316 = vpack.c.b16 %v1050, %v1043
    %v1317 = vpack.c.b16 %v1051, %v1044
    %v1318 = vpack.c.b16 %v1052, %v1045
    %v1319 = vpack.c.b16 %v1053, %v1046
    %v1320 = vpack.c.b16 %v1061, %v1054
    %v1321 = vpack.c.b16 %v1062, %v1055
    %v1322 = vpack.c.b16 %v1063, %v1056
    %v1323 = vpack.c.b16 %v1064, %v1057
    %v1324 = vpack.c.b16 %v1065, %v1058
    %v1325 = vpack.c.b16 %v1066, %v1059
    %v1326 = vpack.c.b16 %v1067, %v1060
    %v1327 = vpack.c.b16 %v1075, %v1068
    %v1328 = vpack.c.b16 %v1076, %v1069
    %v1329 = vpack.c.b16 %v1077, %v1070
    %v1330 = vpack.c.b16 %v1078, %v1071
    %v1331 = vpack.c.b16 %v1079, %v1072
    %v1332 = vpack.c.b16 %v1080, %v1073
    %v1333 = vpack.c.b16 %v1081, %v1074
    %v1334 = vpack.c.b16 %v1089, %v1082
    %v1335 = vpack.c.b16 %v1090, %v1083
    %v1336 = vpack.c.b16 %v1091, %v1084
    %v1337 = vpack.c.b16 %v1092, %v1085
    %v1338 = vpack.c.b16 %v1093, %v1086
    %v1339 = vpack.c.b16 %v1094, %v1087
    %v1340 = vpack.c.b16 %v1095, %v1088
    %v1341 = vpack.c.b16 %v1103, %v1096
    %v1342 = vpack.c.b16 %v1104, %v1097
    %v1343 = vpack.c.b16 %v1105, %v1098
    %v1344 = vpack.c.b16 %v1106, %v1099
    %v1345 = vpack.c.b16 %v1107, %v1100
    %v1346 = vpack.c.b16 %v1108, %v1101
    %v1347 = vpack.c.b16 %v1109, %v1102
    %v1348 = vpack.c.b16 %v1117, %v1110
    %v1349 = vpack.c.b16 %v1118, %v1111
    %v1350 = vpack.c.b16 %v1119, %v1112
    %v1351 = vpack.c.b16 %v1120, %v1113
    %v1352 = vpack.c.b16 %v1121, %v1114
    %v1353 = vpack.c.b16 %v1122, %v1115
    %v1354 = vpack.c.b16 %v1123, %v1116
    %v1355 = vpack.c.b16 %v1131, %v1124
    %v1356 = vpack.c.b16 %v1132, %v1125
    %v1357 = vpack.c.b16 %v1133, %v1126
    %v1358 = vpack.c.b16 %v1134, %v1127
    %v1359 = vpack.c.b16 %v1135, %v1128
    %v1360 = vpack.c.b16 %v1136, %v1129
    %v1361 = vpack.c.b16 %v1137, %v1130
    %1586 = vmatprep.subr.bf16.mxu0 %v1139
    %1587 = vmatpush1.bf16.msra.mxu0 %v1138
    %1588 = vmatprep.subr.bf16.mxu0 %v1146
    %1589 = vmatpush1.bf16.msra.mxu0 %v1145
    %1590 = vmatprep.subr.bf16.mxu0 %v1153
    %1591 = vmatpush1.bf16.msra.mxu0 %v1152
    %1592 = vmatprep.subr.bf16.mxu0 %v1160
    %1593 = vmatpush1.bf16.msra.mxu0 %v1159
    %1594 = vmatprep.subr.bf16.mxu0 %v1167
    %1595 = vmatpush1.bf16.msra.mxu0 %v1166
    %1596 = vmatprep.subr.bf16.mxu0 %v1174
    %1597 = vmatpush1.bf16.msra.mxu0 %v1173
    %1598 = vmatprep.subr.bf16.mxu0 %v1181
    %1599 = vmatpush1.bf16.msra.mxu0 %v1180
    %1600 = vmatprep.subr.bf16.mxu0 %v1188
    %1601 = vmatpush1.bf16.msra.mxu0 %v1187
    %1602 = vmatprep.subr.bf16.mxu0 %v1195
    %1603 = vmatpush1.bf16.msra.mxu0 %v1194
    %1604 = vmatprep.subr.bf16.mxu0 %v1202
    %1605 = vmatpush1.bf16.msra.mxu0 %v1201
    %1606 = vmatprep.subr.bf16.mxu0 %v1209
    %1607 = vmatpush1.bf16.msra.mxu0 %v1208
    %1608 = vmatprep.subr.bf16.mxu0 %v1216
    %1609 = vmatpush1.bf16.msra.mxu0 %v1215
    %1610 = vmatprep.subr.bf16.mxu0 %v1223
    %1611 = vmatpush1.bf16.msra.mxu0 %v1222
    %1612 = vmatprep.subr.bf16.mxu0 %v1230
    %1613 = vmatpush1.bf16.msra.mxu0 %v1229
    %1614 = vmatprep.subr.bf16.mxu0 %v1237
    %1615 = vmatpush1.bf16.msra.mxu0 %v1236
    %1616 = vmatprep.subr.bf16.mxu0 %v1244
    %1617 = vmatpush1.bf16.msra.mxu0 %v1243
    %1618 = vmatprep.mubr.bf16.mxu0 %v175
    %1619 = vmatmul.mubr.bf16.gmra.mrb[0].mxu0 %v174
    %v1620 = vpop.f32.mrb[0].mxu0
    %v1621 = vadd.f32 0.0, %v1620
    %v1622 = vpop.f32.mrb[0].mxu0
    %v1623 = vadd.f32 0.0, %v1622
    %v1624 = vpop.f32.mrb[0].mxu0
    %v1625 = vpop.f32.mrb[0].mxu0
    %1626 = vdwg.mxu0
    %1627 = vmatprep.subr.bf16.mxu0 %v1251
    %1628 = vmatpush1.bf16.msra.mxu0 %v1250
    %1629 = vmatprep.subr.bf16.mxu0 %v1258
    %1630 = vmatpush1.bf16.msra.mxu0 %v1257
    %1631 = vmatprep.subr.bf16.mxu0 %v1265
    %1632 = vmatpush1.bf16.msra.mxu0 %v1264
    %1633 = vmatprep.subr.bf16.mxu0 %v1272
    %1634 = vmatpush1.bf16.msra.mxu0 %v1271
    %1635 = vmatprep.subr.bf16.mxu0 %v1279
    %1636 = vmatpush1.bf16.msra.mxu0 %v1278
    %1637 = vmatprep.subr.bf16.mxu0 %v1286
    %1638 = vmatpush1.bf16.msra.mxu0 %v1285
    %1639 = vmatprep.subr.bf16.mxu0 %v1293
    %1640 = vmatpush1.bf16.msra.mxu0 %v1292
    %1641 = vmatprep.subr.bf16.mxu0 %v1300
    %1642 = vmatpush1.bf16.msra.mxu0 %v1299
    %1643 = vmatprep.subr.bf16.mxu0 %v1307
    %1644 = vmatpush1.bf16.msra.mxu0 %v1306
    %1645 = vmatprep.subr.bf16.mxu0 %v1314
    %1646 = vmatpush1.bf16.msra.mxu0 %v1313
    %1647 = vmatprep.subr.bf16.mxu0 %v1321
    %1648 = vmatpush1.bf16.msra.mxu0 %v1320
    %1649 = vmatprep.subr.bf16.mxu0 %v1328
    %1650 = vmatpush1.bf16.msra.mxu0 %v1327
    %1651 = vmatprep.subr.bf16.mxu0 %v1335
    %1652 = vmatpush1.bf16.msra.mxu0 %v1334
    %1653 = vmatprep.subr.bf16.mxu0 %v1342
    %1654 = vmatpush1.bf16.msra.mxu0 %v1341
    %1655 = vmatprep.subr.bf16.mxu0 %v1349
    %1656 = vmatpush1.bf16.msra.mxu0 %v1348
    %1657 = vmatprep.subr.bf16.mxu0 %v1356
    %1658 = vmatpush1.bf16.msra.mxu0 %v1355
    %1659 = vmatprep.mubr.bf16.mxu0 %v177
    %1660 = vmatmul.mubr.bf16.gmra.mrb[0].mxu0 %v176
    %v1661 = vpop.f32.mrb[0].mxu0
    %v1662 = vadd.f32 %v1621, %v1661
    %v1663 = vpop.f32.mrb[0].mxu0
    %v1664 = vadd.f32 %v1623, %v1663
    %v1665 = vpop.f32.mrb[0].mxu0
    %v1666 = vpop.f32.mrb[0].mxu0
    %1667 = vdwg.mxu0
    %1668 = vmatprep.subr.bf16.mxu0 %v1141
    %1669 = vmatpush1.bf16.msra.mxu0 %v1140
    %1670 = vmatprep.subr.bf16.mxu0 %v1148
    %1671 = vmatpush1.bf16.msra.mxu0 %v1147
    %1672 = vmatprep.subr.bf16.mxu0 %v1155
    %1673 = vmatpush1.bf16.msra.mxu0 %v1154
    %1674 = vmatprep.subr.bf16.mxu0 %v1162
    %1675 = vmatpush1.bf16.msra.mxu0 %v1161
    %1676 = vmatprep.subr.bf16.mxu0 %v1169
    %1677 = vmatpush1.bf16.msra.mxu0 %v1168
    %1678 = vmatprep.subr.bf16.mxu0 %v1176
    %1679 = vmatpush1.bf16.msra.mxu0 %v1175
    %1680 = vmatprep.subr.bf16.mxu0 %v1183
    %1681 = vmatpush1.bf16.msra.mxu0 %v1182
    %1682 = vmatprep.subr.bf16.mxu0 %v1190
    %1683 = vmatpush1.bf16.msra.mxu0 %v1189
    %1684 = vmatprep.subr.bf16.mxu0 %v1197
    %1685 = vmatpush1.bf16.msra.mxu0 %v1196
    %1686 = vmatprep.subr.bf16.mxu0 %v1204
    %1687 = vmatpush1.bf16.msra.mxu0 %v1203
    %1688 = vmatprep.subr.bf16.mxu0 %v1211
    %1689 = vmatpush1.bf16.msra.mxu0 %v1210
    %1690 = vmatprep.subr.bf16.mxu0 %v1218
    %1691 = vmatpush1.bf16.msra.mxu0 %v1217
    %1692 = vmatprep.subr.bf16.mxu0 %v1225
    %1693 = vmatpush1.bf16.msra.mxu0 %v1224
    %1694 = vmatprep.subr.bf16.mxu0 %v1232
    %1695 = vmatpush1.bf16.msra.mxu0 %v1231
    %1696 = vmatprep.subr.bf16.mxu0 %v1239
    %1697 = vmatpush1.bf16.msra.mxu0 %v1238
    %1698 = vmatprep.subr.bf16.mxu0 %v1246
    %1699 = vmatpush1.bf16.msra.mxu0 %v1245
    %1700 = vmatprep.mubr.bf16.mxu0 %v175
    %1701 = vmatmul.mubr.bf16.gmra.mrb[0].mxu0 %v174
    %v1702 = vpop.f32.mrb[0].mxu0
    %v1703 = vadd.f32 0.0, %v1702
    %v1704 = vpop.f32.mrb[0].mxu0
    %v1705 = vadd.f32 0.0, %v1704
    %v1706 = vpop.f32.mrb[0].mxu0
    %v1707 = vpop.f32.mrb[0].mxu0
    %1708 = vdwg.mxu0
    %1709 = vmatprep.subr.bf16.mxu0 %v1253
    %1710 = vmatpush1.bf16.msra.mxu0 %v1252
    %1711 = vmatprep.subr.bf16.mxu0 %v1260
    %1712 = vmatpush1.bf16.msra.mxu0 %v1259
    %1713 = vmatprep.subr.bf16.mxu0 %v1267
    %1714 = vmatpush1.bf16.msra.mxu0 %v1266
    %1715 = vmatprep.subr.bf16.mxu0 %v1274
    %1716 = vmatpush1.bf16.msra.mxu0 %v1273
    %1717 = vmatprep.subr.bf16.mxu0 %v1281
    %1718 = vmatpush1.bf16.msra.mxu0 %v1280
    %1719 = vmatprep.subr.bf16.mxu0 %v1288
    %1720 = vmatpush1.bf16.msra.mxu0 %v1287
    %1721 = vmatprep.subr.bf16.mxu0 %v1295
    %1722 = vmatpush1.bf16.msra.mxu0 %v1294
    %1723 = vmatprep.subr.bf16.mxu0 %v1302
    %1724 = vmatpush1.bf16.msra.mxu0 %v1301
    %1725 = vmatprep.subr.bf16.mxu0 %v1309
    %1726 = vmatpush1.bf16.msra.mxu0 %v1308
    %1727 = vmatprep.subr.bf16.mxu0 %v1316
    %1728 = vmatpush1.bf16.msra.mxu0 %v1315
    %1729 = vmatprep.subr.bf16.mxu0 %v1323
    %1730 = vmatpush1.bf16.msra.mxu0 %v1322
    %1731 = vmatprep.subr.bf16.mxu0 %v1330
    %1732 = vmatpush1.bf16.msra.mxu0 %v1329
    %1733 = vmatprep.subr.bf16.mxu0 %v1337
    %1734 = vmatpush1.bf16.msra.mxu0 %v1336
    %1735 = vmatprep.subr.bf16.mxu0 %v1344
    %1736 = vmatpush1.bf16.msra.mxu0 %v1343
    %1737 = vmatprep.subr.bf16.mxu0 %v1351
    %1738 = vmatpush1.bf16.msra.mxu0 %v1350
    %1739 = vmatprep.subr.bf16.mxu0 %v1358
    %1740 = vmatpush1.bf16.msra.mxu0 %v1357
    %1741 = vmatprep.mubr.bf16.mxu0 %v177
    %1742 = vmatmul.mubr.bf16.gmra.mrb[0].mxu0 %v176
    %v1743 = vpop.f32.mrb[0].mxu0
    %v1744 = vadd.f32 %v1703, %v1743
    %v1745 = vpop.f32.mrb[0].mxu0
    %v1746 = vadd.f32 %v1705, %v1745
    %v1747 = vpop.f32.mrb[0].mxu0
    %v1748 = vpop.f32.mrb[0].mxu0
    %1749 = vdwg.mxu0
    %1750 = vmatprep.subr.bf16.mxu0 %v1143
    %1751 = vmatpush1.bf16.msra.mxu0 %v1142
    %1752 = vmatprep.subr.bf16.mxu0 %v1150
    %1753 = vmatpush1.bf16.msra.mxu0 %v1149
    %1754 = vmatprep.subr.bf16.mxu0 %v1157
    %1755 = vmatpush1.bf16.msra.mxu0 %v1156
    %1756 = vmatprep.subr.bf16.mxu0 %v1164
    %1757 = vmatpush1.bf16.msra.mxu0 %v1163
    %1758 = vmatprep.subr.bf16.mxu0 %v1171
    %1759 = vmatpush1.bf16.msra.mxu0 %v1170
    %1760 = vmatprep.subr.bf16.mxu0 %v1178
    %1761 = vmatpush1.bf16.msra.mxu0 %v1177
    %1762 = vmatprep.subr.bf16.mxu0 %v1185
    %1763 = vmatpush1.bf16.msra.mxu0 %v1184
    %1764 = vmatprep.subr.bf16.mxu0 %v1192
    %1765 = vmatpush1.bf16.msra.mxu0 %v1191
    %1766 = vmatprep.subr.bf16.mxu0 %v1199
    %1767 = vmatpush1.bf16.msra.mxu0 %v1198
    %1768 = vmatprep.subr.bf16.mxu0 %v1206
    %1769 = vmatpush1.bf16.msra.mxu0 %v1205
    %1770 = vmatprep.subr.bf16.mxu0 %v1213
    %1771 = vmatpush1.bf16.msra.mxu0 %v1212
    %1772 = vmatprep.subr.bf16.mxu0 %v1220
    %1773 = vmatpush1.bf16.msra.mxu0 %v1219
    %1774 = vmatprep.subr.bf16.mxu0 %v1227
    %1775 = vmatpush1.bf16.msra.mxu0 %v1226
    %1776 = vmatprep.subr.bf16.mxu0 %v1234
    %1777 = vmatpush1.bf16.msra.mxu0 %v1233
    %1778 = vmatprep.subr.bf16.mxu0 %v1241
    %1779 = vmatpush1.bf16.msra.mxu0 %v1240
    %1780 = vmatprep.subr.bf16.mxu0 %v1248
    %1781 = vmatpush1.bf16.msra.mxu0 %v1247
    %1782 = vmatprep.mubr.bf16.mxu0 %v175
    %1783 = vmatmul.mubr.bf16.gmra.mrb[0].mxu0 %v174
    %v1784 = vpop.f32.mrb[0].mxu0
    %v1785 = vadd.f32 0.0, %v1784
    %v1786 = vpop.f32.mrb[0].mxu0
    %v1787 = vadd.f32 0.0, %v1786
    %v1788 = vpop.f32.mrb[0].mxu0
    %v1789 = vpop.f32.mrb[0].mxu0
    %1790 = vdwg.mxu0
    %1791 = vmatprep.subr.bf16.mxu0 %v1255
    %1792 = vmatpush1.bf16.msra.mxu0 %v1254
    %1793 = vmatprep.subr.bf16.mxu0 %v1262
    %1794 = vmatpush1.bf16.msra.mxu0 %v1261
    %1795 = vmatprep.subr.bf16.mxu0 %v1269
    %1796 = vmatpush1.bf16.msra.mxu0 %v1268
    %1797 = vmatprep.subr.bf16.mxu0 %v1276
    %1798 = vmatpush1.bf16.msra.mxu0 %v1275
    %1799 = vmatprep.subr.bf16.mxu0 %v1283
    %1800 = vmatpush1.bf16.msra.mxu0 %v1282
    %1801 = vmatprep.subr.bf16.mxu0 %v1290
    %1802 = vmatpush1.bf16.msra.mxu0 %v1289
    %1803 = vmatprep.subr.bf16.mxu0 %v1297
    %1804 = vmatpush1.bf16.msra.mxu0 %v1296
    %1805 = vmatprep.subr.bf16.mxu0 %v1304
    %1806 = vmatpush1.bf16.msra.mxu0 %v1303
    %1807 = vmatprep.subr.bf16.mxu0 %v1311
    %1808 = vmatpush1.bf16.msra.mxu0 %v1310
    %1809 = vmatprep.subr.bf16.mxu0 %v1318
    %1810 = vmatpush1.bf16.msra.mxu0 %v1317
    %1811 = vmatprep.subr.bf16.mxu0 %v1325
    %1812 = vmatpush1.bf16.msra.mxu0 %v1324
    %1813 = vmatprep.subr.bf16.mxu0 %v1332
    %1814 = vmatpush1.bf16.msra.mxu0 %v1331
    %1815 = vmatprep.subr.bf16.mxu0 %v1339
    %1816 = vmatpush1.bf16.msra.mxu0 %v1338
    %1817 = vmatprep.subr.bf16.mxu0 %v1346
    %1818 = vmatpush1.bf16.msra.mxu0 %v1345
    %1819 = vmatprep.subr.bf16.mxu0 %v1353
    %1820 = vmatpush1.bf16.msra.mxu0 %v1352
    %1821 = vmatprep.subr.bf16.mxu0 %v1360
    %1822 = vmatpush1.bf16.msra.mxu0 %v1359
    %1823 = vmatprep.mubr.bf16.mxu0 %v177
    %1824 = vmatmul.mubr.bf16.gmra.mrb[0].mxu0 %v176
    %v1825 = vpop.f32.mrb[0].mxu0
    %v1826 = vadd.f32 %v1785, %v1825
    %v1827 = vpop.f32.mrb[0].mxu0
    %v1828 = vadd.f32 %v1787, %v1827
    %v1829 = vpop.f32.mrb[0].mxu0
    %v1830 = vpop.f32.mrb[0].mxu0
    %1831 = vdwg.mxu0
    %1832 = vmatprep.subr.bf16.mxu0 0
    %1833 = vmatpush1.bf16.msra.mxu0 %v1144
    %1834 = vmatprep.subr.bf16.mxu0 0
    %1835 = vmatpush1.bf16.msra.mxu0 %v1151
    %1836 = vmatprep.subr.bf16.mxu0 0
    %1837 = vmatpush1.bf16.msra.mxu0 %v1158
    %1838 = vmatprep.subr.bf16.mxu0 0
    %1839 = vmatpush1.bf16.msra.mxu0 %v1165
    %1840 = vmatprep.subr.bf16.mxu0 0
    %1841 = vmatpush1.bf16.msra.mxu0 %v1172
    %1842 = vmatprep.subr.bf16.mxu0 0
    %1843 = vmatpush1.bf16.msra.mxu0 %v1179
    %1844 = vmatprep.subr.bf16.mxu0 0
    %1845 = vmatpush1.bf16.msra.mxu0 %v1186
    %1846 = vmatprep.subr.bf16.mxu0 0
    %1847 = vmatpush1.bf16.msra.mxu0 %v1193
    %1848 = vmatprep.subr.bf16.mxu0 0
    %1849 = vmatpush1.bf16.msra.mxu0 %v1200
    %1850 = vmatprep.subr.bf16.mxu0 0
    %1851 = vmatpush1.bf16.msra.mxu0 %v1207
    %1852 = vmatprep.subr.bf16.mxu0 0
    %1853 = vmatpush1.bf16.msra.mxu0 %v1214
    %1854 = vmatprep.subr.bf16.mxu0 0
    %1855 = vmatpush1.bf16.msra.mxu0 %v1221
    %1856 = vmatprep.subr.bf16.mxu0 0
    %1857 = vmatpush1.bf16.msra.mxu0 %v1228
    %1858 = vmatprep.subr.bf16.mxu0 0
    %1859 = vmatpush1.bf16.msra.mxu0 %v1235
    %1860 = vmatprep.subr.bf16.mxu0 0
    %1861 = vmatpush1.bf16.msra.mxu0 %v1242
    %1862 = vmatprep.subr.bf16.mxu0 0
    %1863 = vmatpush1.bf16.msra.mxu0 %v1249
    %1864 = vmatprep.mubr.bf16.mxu0 %v175
    %1865 = vmatmul.mubr.bf16.gmra.mrb[0].mxu0 %v174
    %v1866 = vpop.f32.mrb[0].mxu0
    %v1867 = vadd.f32 0.0, %v1866
    %v1868 = vpop.f32.mrb[0].mxu0
    %v1869 = vpop.f32.mrb[0].mxu0
    %v1870 = vpop.f32.mrb[0].mxu0
    %1871 = vdwg.mxu0
    %1872 = vmatprep.subr.bf16.mxu0 0
    %1873 = vmatpush1.bf16.msra.mxu0 %v1256
    %1874 = vmatprep.subr.bf16.mxu0 0
    %1875 = vmatpush1.bf16.msra.mxu0 %v1263
    %1876 = vmatprep.subr.bf16.mxu0 0
    %1877 = vmatpush1.bf16.msra.mxu0 %v1270
    %1878 = vmatprep.subr.bf16.mxu0 0
    %1879 = vmatpush1.bf16.msra.mxu0 %v1277
    %1880 = vmatprep.subr.bf16.mxu0 0
    %1881 = vmatpush1.bf16.msra.mxu0 %v1284
    %1882 = vmatprep.subr.bf16.mxu0 0
    %1883 = vmatpush1.bf16.msra.mxu0 %v1291
    %1884 = vmatprep.subr.bf16.mxu0 0
    %1885 = vmatpush1.bf16.msra.mxu0 %v1298
    %1886 = vmatprep.subr.bf16.mxu0 0
    %1887 = vmatpush1.bf16.msra.mxu0 %v1305
    %1888 = vmatprep.subr.bf16.mxu0 0
    %1889 = vmatpush1.bf16.msra.mxu0 %v1312
    %1890 = vmatprep.subr.bf16.mxu0 0
    %1891 = vmatpush1.bf16.msra.mxu0 %v1319
    %1892 = vmatprep.subr.bf16.mxu0 0
    %1893 = vmatpush1.bf16.msra.mxu0 %v1326
    %1894 = vmatprep.subr.bf16.mxu0 0
    %1895 = vmatpush1.bf16.msra.mxu0 %v1333
    %1896 = vmatprep.subr.bf16.mxu0 0
    %1897 = vmatpush1.bf16.msra.mxu0 %v1340
    %1898 = vmatprep.subr.bf16.mxu0 0
    %1899 = vmatpush1.bf16.msra.mxu0 %v1347
    %1900 = vmatprep.subr.bf16.mxu0 0
    %1901 = vmatpush1.bf16.msra.mxu0 %v1354
    %1902 = vmatprep.subr.bf16.mxu0 0
    %1903 = vmatpush1.bf16.msra.mxu0 %v1361
    %1904 = vmatprep.mubr.bf16.mxu0 %v177
    %1905 = vmatmul.mubr.bf16.gmra.mrb[0].mxu0 %v176
    %v1906 = vpop.f32.mrb[0].mxu0
    %v1907 = vadd.f32 %v1867, %v1906
    %v1908 = vpop.f32.mrb[0].mxu0
    %v1909 = vpop.f32.mrb[0].mxu0
    %v1910 = vpop.f32.mrb[0].mxu0
    %1911 = vdwg.mxu0
    %v1912 = vld [vmem:[%s4] sm:$0x7f]
    %v1914 = vlaneseq
    %v1915 = vshrl.u32 %v1914, 7
    %v1916 = vsub.s32 0, %v1915
    %v1917 = vrot.slane %v1912, %v1916
    %v1918 = vlaneseq
    %v1919 = vshrl.u32 %v1918, 7
    %v1920 = vsub.s32 1, %v1919
    %v1921 = vrot.slane %v1912, %v1920
    %v1922 = vlaneseq
    %v1923 = vshrl.u32 %v1922, 7
    %v1924 = vsub.s32 2, %v1923
    %v1925 = vrot.slane %v1912, %v1924
    %v1926 = vlaneseq
    %v1927 = vshrl.u32 %v1926, 7
    %v1928 = vsub.s32 3, %v1927
    %v1929 = vrot.slane %v1912, %v1928
    %v1930 = vlaneseq
    %v1931 = vshrl.u32 %v1930, 7
    %v1932 = vsub.s32 4, %v1931
    %v1933 = vrot.slane %v1912, %v1932
    %v1934 = vlaneseq
    %v1935 = vshrl.u32 %v1934, 7
    %v1936 = vsub.s32 5, %v1935
    %v1937 = vrot.slane %v1912, %v1936
    %v1938 = vlaneseq
    %v1939 = vshrl.u32 %v1938, 7
    %v1940 = vsub.s32 6, %v1939
    %v1941 = vrot.slane %v1912, %v1940
    %v1949 = vadd.f32 %v1662, %v1917
    %v1950 = vadd.f32 %v1664, %v1921
    %v1951 = vadd.f32 %v1744, %v1925
    %v1952 = vadd.f32 %v1746, %v1929
    %v1953 = vadd.f32 %v1826, %v1933
    %v1954 = vadd.f32 %v1828, %v1937
    %v1955 = vadd.f32 %v1907, %v1941
    %v1956 = vmul.f32 %v1949, 0.5
    %v1957 = vmul.f32 %v1950, 0.5
    %v1958 = vmul.f32 %v1951, 0.5
    %v1959 = vmul.f32 %v1952, 0.5
    %v1960 = vmul.f32 %v1953, 0.5
    %v1961 = vmul.f32 %v1954, 0.5
    %v1962 = vmul.f32 %v1955, 0.5
    %v1963 = vtanh.pop %v1956
    %v1964 = vtanh.pop %v1957
    %v1965 = vtanh.pop %v1958
    %v1966 = vtanh.pop %v1959
    %v1967 = vtanh.pop %v1960
    %v1968 = vtanh.pop %v1961
    %v1969 = vtanh.pop %v1962
    %v1970 = vmul.f32 %v1963, 0.5
    %v1971 = vmul.f32 %v1964, 0.5
    %v1972 = vmul.f32 %v1965, 0.5
    %v1973 = vmul.f32 %v1966, 0.5
    %v1974 = vmul.f32 %v1967, 0.5
    %v1975 = vmul.f32 %v1968, 0.5
    %v1976 = vmul.f32 %v1969, 0.5
    %v1977 = vadd.f32 %v1970, 0.5
    %v1978 = vadd.f32 %v1971, 0.5
    %v1979 = vadd.f32 %v1972, 0.5
    %v1980 = vadd.f32 %v1973, 0.5
    %v1981 = vadd.f32 %v1974, 0.5
    %v1982 = vadd.f32 %v1975, 0.5
    %v1983 = vadd.f32 %v1976, 0.5
    %1984 = vst [vmem:[#allocation7] sm:$0xff] %v1977
    %1985 = vst [vmem:[#allocation7 + $0x8] sm:$0xff] %v1978
    %1986 = vst [vmem:[#allocation7 + $0x10] sm:$0xff] %v1979
    %1987 = vst [vmem:[#allocation7 + $0x18] sm:$0xff] %v1980
    %1988 = vst [vmem:[#allocation7 + $0x20] sm:$0xff] %v1981
    %1989 = vst [vmem:[#allocation7 + $0x28] sm:$0xff] %v1982
    %vm1990 = vcmask 130048
    %1991 = vst.msk [vmem:[#allocation7 + $0x30] sm:$0xff] %vm1990, %v1983
    // Predicated region
    $region30: #{tpu_custom_call.1} parent=1 // pred_check
      _
    $region31: #{tpu_custom_call.1} parent=1 // pred_check_branch
      %1993 = sbr.rel (0) target = $region33
    $region32: #{tpu_custom_call.1} parent=1 // pred_region
      %s1995 = ssub.s32 896, 896
      %1996 = vsyncadd [#allocation4], %s1995
      %s1998 = sshll.u32 [#allocation7], 4
      %s1999 = int_to_ptr.vmem [resolvable:$true] %s1998
      %2001 = dma.vmem_to_hbm [thread:$0]  %s1999, 896, %s5, [#allocation4]
    $region33: #{tpu_custom_call.1} parent=1 // pred_fallthru
      _
    // Predicated region
    $region34: #{tpu_custom_call.1} parent=1 // pred_check
      _
    $region35: #{tpu_custom_call.1} parent=1 // pred_check_branch
      %2003 = sbr.rel (0) target = $region37
    $region36: #{tpu_custom_call.1} parent=1 // pred_region
      %2004 = dma.done [#allocation4], 896
    $region37: #{tpu_custom_call.1} parent=1 // pred_fallthru
      _
    %2005 = vsyncpa [#allocation3], 1
    %2006 = vsyncpa [#allocation6], 1
    %2007 = vsyncpa [#allocation4], 1

</llo_original>
